<compile_context>
chip_gen: v7x
topology: tpu7x:2x2x1
jax: 0.10.0
libtpu: 0.0.40
codegen_flags: <defaults>
</compile_context>

<pallas_src>
import functools

import jax
import jax.numpy as jnp
from jax import lax
from jax.experimental import pallas as pl
from jax.experimental.pallas import tpu as pltpu

LRELU_SLOPE = 0.1
HALO = 128                       # halo block width (>= all conv receptive-field halves)

_VMEM_CACHE = None


def _vmem_budget():
    """(scoped vmem limit, per-call tile working-set budget), generation aware."""
    global _VMEM_CACHE
    if _VMEM_CACHE is None:
        phys = 64 * 1024 * 1024
        try:
            phys = int(pltpu.get_tpu_info().vmem_capacity_bytes)
        except Exception:
            pass
        limit = (phys * 3) // 4              # ~96 MiB on v5e/v6e (128 MiB), ~48 MiB on v7x
        _VMEM_CACHE = (limit, (limit * 2) // 3)
    return _VMEM_CACHE


def _pick_t_tile(cin, cout, n_taps, n_stages, itemsize, t_out, batch):
    """Largest multiple-of-128 time tile whose working set fits the VMEM budget."""
    _, budget = _vmem_budget()
    fixed = 2 * n_taps * cout * cin * itemsize        # resident taps (x2 buffering)
    fixed += 4 * cin * HALO * itemsize                # two halo blocks, double-buffered
    fixed += 8 * cout * 4                             # bias
    per_col = 4 * (cin + cout) * itemsize             # double-buffered main in/out blocks
    per_col += 4 * (2 * cin + (n_stages + 1) * cout)  # in-kernel temporaries at f32 width
    avail = max(budget - fixed, per_col * HALO)
    tile = (avail // per_col) // HALO * HALO
    tile = max(HALO, min(2048, tile))
    tile = min(tile, pl.cdiv(t_out, HALO) * HALO)
    if batch == 1 and t_out >= 2 * HALO:
        # keep >=2 time tiles so both v7x cores / the BlockSpec pipeline have work
        tile = min(tile, pl.cdiv(pl.cdiv(t_out, 2), HALO) * HALO)
    return int(tile)


# ---------------------------------------------------------------------------
# In-kernel helpers
# ---------------------------------------------------------------------------
def _masked_window(xl_ref, xm_ref, xr_ref, t0, t_in):
    """Concatenate [left-halo | main | right-halo] and zero every column whose
    global index lies outside [0, t_in) (this *is* the zero padding)."""
    t_tile = xm_ref.shape[-1]
    cl = lax.broadcasted_iota(jnp.int32, (1, HALO), 1) + (t0 - HALO)
    cm = lax.broadcasted_iota(jnp.int32, (1, t_tile), 1) + t0
    cr = lax.broadcasted_iota(jnp.int32, (1, HALO), 1) + (t0 + t_tile)
    xl = jnp.where(jnp.logical_and(cl >= 0, cl < t_in), xl_ref[...], 0)
    xm = jnp.where(cm < t_in, xm_ref[...], 0)
    xr = jnp.where(cr < t_in, xr_ref[...], 0)
    return jnp.concatenate([xl, xm, xr], axis=-1)      # (C, t_tile + 2*HALO)


def _lrelu_k(x):
    return jnp.where(x >= 0, x, LRELU_SLOPE * x)


# ---------------------------------------------------------------------------
# Kernel 1: single dilated conv (optional fused lrelu-in / tanh-out)
#   out[co, t] = b[co] + sum_k W[k, co, :] @ x_zp[:, t + offset + k*dilation]
# ---------------------------------------------------------------------------
def _conv_kernel(xl_ref, xm_ref, xr_ref, w_ref, b_ref, o_ref, *,
                 K, dilation, offset, t_in, cout_real, pre_lrelu, out_tanh):
    t_tile = xm_ref.shape[-1]
    t0 = pl.program_id(1) * t_tile
    x_ext = _masked_window(xl_ref, xm_ref, xr_ref, t0, t_in)
    if pre_lrelu:
        x_ext = _lrelu_k(x_ext)                        # lrelu(0)==0 -> pad order is safe
    cout = w_ref.shape[1]
    acc = jnp.broadcast_to(b_ref[...], (cout, t_tile)).astype(jnp.float32)
    base = HALO + offset
    for k in range(K):                                 # per-tap MXU accumulation (no im2col)
        s0 = base + k * dilation
        acc = acc + jnp.dot(w_ref[k], x_ext[:, s0:s0 + t_tile],
                            preferred_element_type=jnp.float32)
    res = acc[:cout_real] if cout_real != cout else acc
    if out_tanh:
        res = jnp.tanh(res)
    o_ref[...] = res.astype(o_ref.dtype)


# ---------------------------------------------------------------------------
# Kernel 2: a whole ResBlock (chain of n convs, each x <- x + conv(lrelu(x)))
# computed in-VMEM with shrinking margins; optional stream accumulation.
# ---------------------------------------------------------------------------
def _resblock_kernel(*refs, K, dilations, t_in, add_stream):
    if add_stream:
        xl_ref, xm_ref, xr_ref, w_ref, b_ref, s_ref, o_ref = refs
    else:
        xl_ref, xm_ref, xr_ref, w_ref, b_ref, o_ref = refs
        s_ref = None
    n = len(dilations)
    C = w_ref.shape[2]
    t_tile = xm_ref.shape[-1]
    dt = xm_ref.dtype
    t0 = pl.program_id(1) * t_tile

    halves = [(K - 1) * d // 2 for d in dilations]
    margins = [sum(halves[i + 1:]) for i in range(n)]  # extra columns needed downstream

    cur = _masked_window(xl_ref, xm_ref, xr_ref, t0, t_in)   # margin = HALO
    p = HALO
    final = None
    for i in range(n):
        q = margins[i]
        width = t_tile + 2 * q
        d, h = dilations[i], halves[i]
        xin = _lrelu_k(cur)
        acc = jnp.broadcast_to(b_ref[i], (C, width)).astype(jnp.float32)
        for k in range(K):
            s0 = p - q - h + k * d
            acc = acc + jnp.dot(w_ref[i, k], xin[:, s0:s0 + width],
                                preferred_element_type=jnp.float32)
        out = acc + cur[:, p - q:p - q + width].astype(jnp.float32)   # residual add
        if i < n - 1:
            # re-apply the zero-padding semantics before the next conv in the chain
            col = lax.broadcasted_iota(jnp.int32, (1, width), 1) + (t0 - q)
            out = jnp.where(jnp.logical_and(col >= 0, col < t_in), out, 0.0)
            cur = out.astype(dt)
            p = q
        else:
            final = out
    if add_stream:                                     # fused MRF stream accumulation
        final = final + s_ref[...].astype(jnp.float32)
    o_ref[...] = final.astype(o_ref.dtype)


# ---------------------------------------------------------------------------
# pallas_call wrappers
# ---------------------------------------------------------------------------
def pallas_conv1d(x, w, b, *, dilation=1, offset, t_out, pre_lrelu=False,
                  out_tanh=False, out_dtype=None):
    """out[b, co, t] = bias[co] + sum_{k,ci} w[co,ci,k] * x_zp[b, ci, t + offset + k*dil]
    where x_zp is x implicitly zero-padded (handled in-kernel)."""
    B, Cin, T = x.shape
    Cout, Cin_w, K = w.shape
    assert Cin_w == Cin
    assert -HALO <= offset and offset + (K - 1) * dilation <= HALO, \
        "conv receptive field must fit the 128-wide halo blocks"

    dtype = x.dtype
    out_dtype = out_dtype or dtype

    cout_real = Cout
    cpad = (-Cout) % 8                      # pad tiny Cout for the MXU only; HBM write
    if cpad:                                # stays at the real channel count.
        w = jnp.pad(w, ((0, cpad), (0, 0), (0, 0)))
        b = jnp.pad(b, ((0, cpad),))
    Cout_c = Cout + cpad

    itemsize = jnp.dtype(dtype).itemsize
    t_tile = _pick_t_tile(Cin, Cout_c, K, 1, itemsize, t_out, B)
    n_t = pl.cdiv(t_out, t_tile)
    hm = t_tile // HALO
    max_hb = max(pl.cdiv(T, HALO) - 1, 0)

    w_k = jnp.transpose(w, (2, 0, 1)).astype(dtype)          # (K, Cout_c, Cin)
    b_col = b.reshape(Cout_c, 1).astype(jnp.float32)

    kernel = functools.partial(
        _conv_kernel, K=K, dilation=dilation, offset=offset, t_in=T,
        cout_real=cout_real, pre_lrelu=pre_lrelu, out_tanh=out_tanh)
    vmem_limit, _ = _vmem_budget()

    return pl.pallas_call(
        kernel,
        out_shape=jax.ShapeDtypeStruct((B, cout_real, t_out), out_dtype),
        grid=(B, n_t),
        in_specs=[
            pl.BlockSpec((None, Cin, HALO),
                         lambda bi, ti: (bi, 0, jnp.maximum(ti * hm - 1, 0))),
            pl.BlockSpec((None, Cin, t_tile), lambda bi, ti: (bi, 0, ti)),
            pl.BlockSpec((None, Cin, HALO),
                         lambda bi, ti: (bi, 0, jnp.minimum((ti + 1) * hm, max_hb))),
            pl.BlockSpec((K, Cout_c, Cin), lambda bi, ti: (0, 0, 0)),
            pl.BlockSpec((Cout_c, 1), lambda bi, ti: (0, 0)),
        ],
        out_specs=pl.BlockSpec((None, cout_real, t_tile), lambda bi, ti: (bi, 0, ti)),
        compiler_params=pltpu.CompilerParams(
            dimension_semantics=("parallel", "parallel"),
            vmem_limit_bytes=vmem_limit),
    )(x, x, x, w_k, b_col)


def pallas_resblock(x, w_stack, b_stack, dilations, *, stream=None):
    """One fused ResBlock: n chained (lrelu -> dilated conv -> +residual) steps,
    optionally adding a previous MRF stream in the epilogue.
    w_stack: (n, K, C, C) compute dtype, b_stack: (n, C, 1) f32."""
    B, C, T = x.shape
    n, K = int(w_stack.shape[0]), int(w_stack.shape[1])
    total_halo = sum((K - 1) * d // 2 for d in dilations)
    assert total_halo <= HALO, "chained ResBlock receptive field must fit the halo"

    dtype = x.dtype
    itemsize = jnp.dtype(dtype).itemsize
    t_tile = _pick_t_tile(C, C, n * K, n, itemsize, T, B)
    n_t = pl.cdiv(T, t_tile)
    hm = t_tile // HALO
    max_hb = max(pl.cdiv(T, HALO) - 1, 0)

    kernel = functools.partial(_resblock_kernel, K=K, dilations=tuple(int(d) for d in dilations),
                               t_in=T, add_stream=stream is not None)
    in_specs = [
        pl.BlockSpec((None, C, HALO),
                     lambda bi, ti: (bi, 0, jnp.maximum(ti * hm - 1, 0))),
        pl.BlockSpec((None, C, t_tile), lambda bi, ti: (bi, 0, ti)),
        pl.BlockSpec((None, C, HALO),
                     lambda bi, ti: (bi, 0, jnp.minimum((ti + 1) * hm, max_hb))),
        pl.BlockSpec((n, K, C, C), lambda bi, ti: (0, 0, 0, 0)),
        pl.BlockSpec((n, C, 1), lambda bi, ti: (0, 0, 0)),
    ]
    args = [x, x, x, w_stack, b_stack]
    if stream is not None:
        in_specs.append(pl.BlockSpec((None, C, t_tile), lambda bi, ti: (bi, 0, ti)))
        args.append(stream)
    vmem_limit, _ = _vmem_budget()

    return pl.pallas_call(
        kernel,
        out_shape=jax.ShapeDtypeStruct((B, C, T), dtype),
        grid=(B, n_t),
        in_specs=in_specs,
        out_specs=pl.BlockSpec((None, C, t_tile), lambda bi, ti: (bi, 0, ti)),
        compiler_params=pltpu.CompilerParams(
            dimension_semantics=("parallel", "parallel"),
            vmem_limit_bytes=vmem_limit),
    )(*args)


# ---------------------------------------------------------------------------
# High-level conv ops
# ---------------------------------------------------------------------------
def conv1d_same(x, w, b, *, dilation=1, w_scale=1.0, **kwargs):
    """PyTorch Conv1d(padding='same', dilation=d); odd K (as used by the module)."""
    K = w.shape[2]
    assert K % 2 == 1
    pad = (K - 1) * dilation // 2
    if w_scale != 1.0:
        w = w * w_scale
    return pallas_conv1d(x, w, b, dilation=dilation, offset=-pad,
                         t_out=x.shape[2], **kwargs)


def conv_transpose1d(x, w_t, b, *, stride, padding, pre_lrelu=False, w_scale=1.0):
    """PyTorch ConvTranspose1d(stride, padding), fully fused: all s polyphase filter
    banks are stacked along Cout and computed in ONE pallas_call (x read once); only
    the final phase interleave is done with a single XLA transpose."""
    B, Cin, T = x.shape
    Cin_w, Cout, K = w_t.shape
    assert Cin_w == Cin
    s = int(stride)
    assert K >= s, "polyphase lowering assumes kernel_size >= stride"
    T_out = (T - 1) * s - 2 * padding + K
    pad_l = K - 1 - padding
    # equivalent forward-conv weight: w_f[co, ci, k] = w_t[ci, co, K-1-k]
    w_f = jnp.transpose(jnp.flip(w_t, axis=2), (1, 0, 2))
    if w_scale != 1.0:
        w_f = w_f * w_scale

    k0 = [(pad_l - r) % s for r in range(s)]
    kp = [-(-(K - k0[r]) // s) for r in range(s)]
    off = [(r + k0[r] - pad_l) // s for r in range(s)]
    off_min = min(off)
    ku = max(kp[r] + off[r] - off_min for r in range(s))
    bank = jnp.zeros((s, Cout, Cin, ku), w_f.dtype)
    for r in range(s):
        sh = off[r] - off_min
        bank = bank.at[r, :, :, sh:sh + kp[r]].set(w_f[:, :, k0[r]::s])
    bank = bank.reshape(s * Cout, Cin, ku)
    b_rep = jnp.tile(b, (s,))

    t_phase = -(-T_out // s)
    out = pallas_conv1d(x, bank, b_rep, dilation=1, offset=off_min,
                        t_out=t_phase, pre_lrelu=pre_lrelu)     # (B, s*Cout, t_phase)
    # TODO(synk): the phase interleave could be folded into the kernel epilogue
    # (strided lane store); kept as one XLA transpose for robustness.
    y = out.reshape(B, s, Cout, t_phase)
    y = jnp.transpose(y, (0, 2, 3, 1)).reshape(B, Cout, t_phase * s)
    return y[:, :, :T_out]


# ---------------------------------------------------------------------------
# Parameter init (torch weight_norm is a reparametrization whose forward equals
# the underlying weight, so plain weights reproduce the forward)
# ---------------------------------------------------------------------------
def init_generator_params(key, in_channels, upsample_kernel_sizes, upsample_channels,
                          upsample_strides, mrf_kernel_sizes, mrf_dilation_list):
    def w_init(k, shape, fan_in):
        return 0.5 * jax.random.normal(k, shape, jnp.float32) / jnp.sqrt(fan_in)

    keys = iter(jax.random.split(key, 512))
    params = {}
    c0 = upsample_channels[0]
    params["input_conv"] = {
        "w": w_init(next(keys), (c0, in_channels, 7), in_channels * 7),
        "b": 0.1 * jax.random.normal(next(keys), (c0,), jnp.float32),
    }
    params["upsample"], params["mrf"] = [], []
    for cin, cout, k, s in zip(upsample_channels[:-1], upsample_channels[1:],
                               upsample_kernel_sizes, upsample_strides):
        params["upsample"].append({
            "w": w_init(next(keys), (cin, cout, k), cin * k / s),   # ConvTranspose1d layout
            "b": 0.1 * jax.random.normal(next(keys), (cout,), jnp.float32),
        })
        mrf = []
        for mk in mrf_kernel_sizes:
            resblock = []
            for d in mrf_dilation_list:
                resblock.append({
                    "w": w_init(next(keys), (cout, cout, mk), cout * mk),
                    "b": 0.1 * jax.random.normal(next(keys), (cout,), jnp.float32),
                    "d": int(d),
                })
            mrf.append(resblock)
        params["mrf"].append(mrf)
    c_last = upsample_channels[-1]
    params["output_conv"] = {
        "w": w_init(next(keys), (1, c_last, 7), c_last * 7),
        "b": 0.1 * jax.random.normal(next(keys), (1,), jnp.float32),
    }
    return params


# ---------------------------------------------------------------------------
# Generator forward (Pallas)
# ---------------------------------------------------------------------------
def generator_forward(params, spectrogram, *, upsample_kernel_sizes, upsample_strides,
                      compute_dtype=jnp.bfloat16):
    x = spectrogram.astype(compute_dtype)
    x = conv1d_same(x, params["input_conv"]["w"], params["input_conv"]["b"])
    scale = 1.0                       # deferred 1/len(mrf) average, folded into weights
    for i, (up, mrf) in enumerate(zip(params["upsample"], params["mrf"])):
        k, s = upsample_kernel_sizes[i], upsample_strides[i]
        # x = upsample(leaky_relu(x / n_prev))  -- lrelu fused, scale folded into weights
        x = conv_transpose1d(x, up["w"], up["b"], stride=s, padding=(k - s) // 2,
                             pre_lrelu=True, w_scale=scale)
        # MRF: each ResBlock is one fused kernel; the stream sum is fused into the
        # last resblock conv's epilogue; the average is deferred to the next layer.
        stream = None
        for resblock in mrf:
            w_stack = jnp.stack([jnp.transpose(cb["w"], (2, 0, 1)) for cb in resblock],
                                axis=0).astype(compute_dtype)          # (n, K, C, C)
            b_stack = jnp.stack([cb["b"] for cb in resblock],
                                axis=0)[:, :, None].astype(jnp.float32)  # (n, C, 1)
            dils = tuple(int(cb["d"]) for cb in resblock)
            stream = pallas_resblock(x, w_stack, b_stack, dils, stream=stream)
        x = stream
        scale = 1.0 / float(len(mrf))
    # final: tanh(output_conv(leaky_relu(x / n))), only the real channel written to HBM
    x = conv1d_same(x, params["output_conv"]["w"], params["output_conv"]["b"],
                    pre_lrelu=True, out_tanh=True, out_dtype=jnp.float32, w_scale=scale)
    return {"audio_gen": x}


# ---------------------------------------------------------------------------
# Pure-lax reference (f32) for correctness checking
# ---------------------------------------------------------------------------
def _lrelu(x):
    return jnp.where(x >= 0, x, LRELU_SLOPE * x)


def _ref_conv_same(x, w, b, dilation=1):
    K = w.shape[2]
    pad = (K - 1) * dilation // 2
    y = lax.conv_general_dilated(x, w, window_strides=(1,), padding=[(pad, pad)],
                                 rhs_dilation=(dilation,),
                                 dimension_numbers=("NCH", "OIH", "NCH"))
    return y + b[None, :, None]


def _ref_conv_transpose(x, w_t, b, stride, padding):
    K = w_t.shape[2]
    w_f = jnp.transpose(jnp.flip(w_t, axis=2), (1, 0, 2))
    pad = K - 1 - padding
    y = lax.conv_general_dilated(x, w_f, window_strides=(1,), padding=[(pad, pad)],
                                 lhs_dilation=(stride,),
                                 dimension_numbers=("NCH", "OIH", "NCH"))
    return y + b[None, :, None]


def _ref_generator(params, spectrogram, *, upsample_kernel_sizes, upsample_strides):
    x = _ref_conv_same(spectrogram, params["input_conv"]["w"], params["input_conv"]["b"])
    for i, (up, mrf) in enumerate(zip(params["upsample"], params["mrf"])):
        k, s = upsample_kernel_sizes[i], upsample_strides[i]
        x = _ref_conv_transpose(_lrelu(x), up["w"], up["b"], s, (k - s) // 2)
        res_stream = None
        for resblock in mrf:
            xr = x
            for cb in resblock:
                xr = xr + _ref_conv_same(_lrelu(xr), cb["w"], cb["b"], cb["d"])
            res_stream = xr if res_stream is None else res_stream + xr
        x = res_stream / float(len(mrf))
    x = _ref_conv_same(_lrelu(x), params["output_conv"]["w"], params["output_conv"]["b"])
    return jnp.tanh(x)


# ---------------------------------------------------------------------------
if __name__ == "__main__":
    key = jax.random.PRNGKey(0)
    k_param, k_in = jax.random.split(key)

    # small config consistent with the module
    in_channels = 4
    upsample_channels = [32, 16, 8]
    upsample_kernel_sizes = [4, 4]
    upsample_strides = [2, 2]
    mrf_kernel_sizes = [3, 7]
    mrf_dilation_list = [1, 3]

    B, T = 2, 16
    spectrogram = jax.random.normal(k_in, (B, in_channels, T), jnp.float32)
    params = init_generator_params(
        k_param, in_channels, upsample_kernel_sizes, upsample_channels,
        upsample_strides, mrf_kernel_sizes, mrf_dilation_list)

    expected_T = T
    for s in upsample_strides:
        expected_T *= s

    ref = _ref_generator(params, spectrogram,
                         upsample_kernel_sizes=upsample_kernel_sizes,
                         upsample_strides=upsample_strides)

    # correctness: f32 Pallas path vs pure-lax reference (tight tolerance)
    out_f32 = generator_forward(params, spectrogram,
                                upsample_kernel_sizes=upsample_kernel_sizes,
                                upsample_strides=upsample_strides,
                                compute_dtype=jnp.float32)["audio_gen"]
    out_f32 = jax.block_until_ready(out_f32)
    assert out_f32.shape == (B, 1, expected_T), out_f32.shape
    err32 = float(jnp.max(jnp.abs(out_f32 - ref)))
    assert err32 < 3e-4, f"f32 Pallas generator mismatch vs lax reference: {err32}"

    # production path: bf16 weights/activations, f32 accumulation (loose smoke check)
    out = generator_forward(params, spectrogram,
                            upsample_kernel_sizes=upsample_kernel_sizes,
                            upsample_strides=upsample_strides,
                            compute_dtype=jnp.bfloat16)
    audio = jax.block_until_ready(out["audio_gen"])
    assert audio.shape == (B, 1, expected_T), audio.shape
    assert bool(jnp.all(jnp.isfinite(audio)))
    err16 = float(jnp.max(jnp.abs(audio - ref)))
    assert err16 < 1e-1, f"bf16 Pallas generator drifted too far from reference: {err16}"

    print("KERNEL_OK")
</pallas_src>

<mosaic_0001>
module attributes {stable_mosaic.version = 11 : i64} {
  func.func @_conv_kernel(%arg0: i32, %arg1: i32, %arg2: memref<1x4x128xf32, #tpu.memory_space<vmem>>, %arg3: memref<1x4x128xf32, #tpu.memory_space<vmem>>, %arg4: memref<1x4x128xf32, #tpu.memory_space<vmem>>, %arg5: memref<7x32x4xf32, #tpu.memory_space<vmem>>, %arg6: memref<32x1xf32, #tpu.memory_space<vmem>>, %arg7: memref<1x32x128xf32, #tpu.memory_space<vmem>>) attributes {dimension_semantics = [#tpu.dimension_semantics<parallel>, #tpu.dimension_semantics<parallel>], iteration_bounds = array<i64: 2, 1>, scalar_prefetch = 0 : i64, scratch_operands = 0 : i64, tpu.core_type = #tpu.core_type<tc>, window_params = [{transform_indices = @transform_0, window_bounds = array<i64: 1, 4, 128>}, {transform_indices = @transform_1, window_bounds = array<i64: 1, 4, 128>}, {transform_indices = @transform_2, window_bounds = array<i64: 1, 4, 128>}, {pipeline_mode = #tpu.pipeline_mode<synchronous>, transform_indices = @transform_3, window_bounds = array<i64: 7, 32, 4>}, {pipeline_mode = #tpu.pipeline_mode<synchronous>, transform_indices = @transform_4, window_bounds = array<i64: 32, 1>}, {transform_indices = @transform_5, window_bounds = array<i64: 1, 32, 128>}]} {
    %c128_i32 = arith.constant 128 : i32
    %0 = arith.muli %arg1, %c128_i32 : i32
    %1 = tpu.iota {dimensions = array<i32: 1>} : vector<1x128xi32>
    %c128_i32_0 = arith.constant 128 : i32
    %2 = arith.subi %0, %c128_i32_0 : i32
    %3 = vector.broadcast %2 : i32 to vector<1x128xi32>
    %4 = arith.addi %1, %3 : vector<1x128xi32>
    %5 = tpu.iota {dimensions = array<i32: 1>} : vector<1x128xi32>
    %6 = vector.broadcast %0 : i32 to vector<1x128xi32>
    %7 = arith.addi %5, %6 : vector<1x128xi32>
    %8 = tpu.iota {dimensions = array<i32: 1>} : vector<1x128xi32>
    %c128_i32_1 = arith.constant 128 : i32
    %9 = arith.addi %0, %c128_i32_1 : i32
    %10 = vector.broadcast %9 : i32 to vector<1x128xi32>
    %11 = arith.addi %8, %10 : vector<1x128xi32>
    %c0_i32 = arith.constant 0 : i32
    %12 = vector.broadcast %c0_i32 : i32 to vector<1x128xi32>
    %13 = arith.cmpi sge, %4, %12 : vector<1x128xi32>
    %c16_i32 = arith.constant 16 : i32
    %14 = vector.broadcast %c16_i32 : i32 to vector<1x128xi32>
    %15 = arith.cmpi slt, %4, %14 : vector<1x128xi32>
    %16 = arith.andi %13, %15 : vector<1x128xi1>
    %c0 = arith.constant 0 : index
    %c0_2 = arith.constant 0 : index
    %c0_3 = arith.constant 0 : index
    %17 = vector.load %arg2[%c0, %c0_2, %c0_3] : memref<1x4x128xf32, #tpu.memory_space<vmem>>, vector<1x4x128xf32>
    %18 = vector.shape_cast %17 : vector<1x4x128xf32> to vector<4x128xf32>
    %c0_i32_4 = arith.constant 0 : i32
    %19 = arith.sitofp %c0_i32_4 : i32 to f32
    %20 = vector.shape_cast %16 : vector<1x128xi1> to vector<1x128xi1>
    %21 = vector.broadcast %20 : vector<1x128xi1> to vector<4x128xi1>
    %22 = vector.broadcast %19 : f32 to vector<4x128xf32>
    %23 = arith.select %21, %18, %22 : vector<4x128xi1>, vector<4x128xf32>
    %c16_i32_5 = arith.constant 16 : i32
    %24 = vector.broadcast %c16_i32_5 : i32 to vector<1x128xi32>
    %25 = arith.cmpi slt, %7, %24 : vector<1x128xi32>
    %c0_6 = arith.constant 0 : index
    %c0_7 = arith.constant 0 : index
    %c0_8 = arith.constant 0 : index
    %26 = vector.load %arg3[%c0_6, %c0_7, %c0_8] : memref<1x4x128xf32, #tpu.memory_space<vmem>>, vector<1x4x128xf32>
    %27 = vector.shape_cast %26 : vector<1x4x128xf32> to vector<4x128xf32>
    %c0_i32_9 = arith.constant 0 : i32
    %28 = arith.sitofp %c0_i32_9 : i32 to f32
    %29 = vector.shape_cast %25 : vector<1x128xi1> to vector<1x128xi1>
    %30 = vector.broadcast %29 : vector<1x128xi1> to vector<4x128xi1>
    %31 = vector.broadcast %28 : f32 to vector<4x128xf32>
    %32 = arith.select %30, %27, %31 : vector<4x128xi1>, vector<4x128xf32>
    %c16_i32_10 = arith.constant 16 : i32
    %33 = vector.broadcast %c16_i32_10 : i32 to vector<1x128xi32>
    %34 = arith.cmpi slt, %11, %33 : vector<1x128xi32>
    %c0_11 = arith.constant 0 : index
    %c0_12 = arith.constant 0 : index
    %c0_13 = arith.constant 0 : index
    %35 = vector.load %arg4[%c0_11, %c0_12, %c0_13] : memref<1x4x128xf32, #tpu.memory_space<vmem>>, vector<1x4x128xf32>
    %36 = vector.shape_cast %35 : vector<1x4x128xf32> to vector<4x128xf32>
    %c0_i32_14 = arith.constant 0 : i32
    %37 = arith.sitofp %c0_i32_14 : i32 to f32
    %38 = vector.shape_cast %34 : vector<1x128xi1> to vector<1x128xi1>
    %39 = vector.broadcast %38 : vector<1x128xi1> to vector<4x128xi1>
    %40 = vector.broadcast %37 : f32 to vector<4x128xf32>
    %41 = arith.select %39, %36, %40 : vector<4x128xi1>, vector<4x128xf32>
    %42 = tpu.concatenate %23, %32, %41 in 1 : vector<4x128xf32>, vector<4x128xf32>, vector<4x128xf32> -> vector<4x384xf32>
    %c0_15 = arith.constant 0 : index
    %c0_16 = arith.constant 0 : index
    %43 = vector.load %arg6[%c0_15, %c0_16] : memref<32x1xf32, #tpu.memory_space<vmem>>, vector<32x1xf32>
    %44 = vector.shape_cast %43 : vector<32x1xf32> to vector<32x1xf32>
    %45 = vector.broadcast %44 : vector<32x1xf32> to vector<32x128xf32>
    %c0_17 = arith.constant 0 : index
    %c0_18 = arith.constant 0 : index
    %c0_19 = arith.constant 0 : index
    %46 = vector.load %arg5[%c0_17, %c0_18, %c0_19] : memref<7x32x4xf32, #tpu.memory_space<vmem>>, vector<1x32x4xf32>
    %47 = vector.shape_cast %46 : vector<1x32x4xf32> to vector<32x4xf32>
    %48 = vector.extract_strided_slice %42 {offsets = [0, 125], sizes = [4, 128], strides = [1, 1]} : vector<4x384xf32> to vector<4x128xf32>
    %cst = arith.constant dense<0.000000e+00> : vector<32x128xf32>
    %49 = tpu.matmul %47, %48, %cst {dimension_numbers = #tpu.dot_dimension_numbers<[1], [0], [0], [1], [0, 0, 1, 1], [], []>} : vector<32x4xf32>, vector<4x128xf32>, vector<32x128xf32> -> vector<32x128xf32>
    %50 = arith.addf %45, %49 : vector<32x128xf32>
    %c1 = arith.constant 1 : index
    %c0_20 = arith.constant 0 : index
    %c0_21 = arith.constant 0 : index
    %51 = vector.load %arg5[%c1, %c0_20, %c0_21] : memref<7x32x4xf32, #tpu.memory_space<vmem>>, vector<1x32x4xf32>
    %52 = vector.shape_cast %51 : vector<1x32x4xf32> to vector<32x4xf32>
    %53 = vector.extract_strided_slice %42 {offsets = [0, 126], sizes = [4, 128], strides = [1, 1]} : vector<4x384xf32> to vector<4x128xf32>
    %cst_22 = arith.constant dense<0.000000e+00> : vector<32x128xf32>
    %54 = tpu.matmul %52, %53, %cst_22 {dimension_numbers = #tpu.dot_dimension_numbers<[1], [0], [0], [1], [0, 0, 1, 1], [], []>} : vector<32x4xf32>, vector<4x128xf32>, vector<32x128xf32> -> vector<32x128xf32>
    %55 = arith.addf %50, %54 : vector<32x128xf32>
    %c2 = arith.constant 2 : index
    %c0_23 = arith.constant 0 : index
    %c0_24 = arith.constant 0 : index
    %56 = vector.load %arg5[%c2, %c0_23, %c0_24] : memref<7x32x4xf32, #tpu.memory_space<vmem>>, vector<1x32x4xf32>
    %57 = vector.shape_cast %56 : vector<1x32x4xf32> to vector<32x4xf32>
    %58 = vector.extract_strided_slice %42 {offsets = [0, 127], sizes = [4, 128], strides = [1, 1]} : vector<4x384xf32> to vector<4x128xf32>
    %cst_25 = arith.constant dense<0.000000e+00> : vector<32x128xf32>
    %59 = tpu.matmul %57, %58, %cst_25 {dimension_numbers = #tpu.dot_dimension_numbers<[1], [0], [0], [1], [0, 0, 1, 1], [], []>} : vector<32x4xf32>, vector<4x128xf32>, vector<32x128xf32> -> vector<32x128xf32>
    %60 = arith.addf %55, %59 : vector<32x128xf32>
    %c3 = arith.constant 3 : index
    %c0_26 = arith.constant 0 : index
    %c0_27 = arith.constant 0 : index
    %61 = vector.load %arg5[%c3, %c0_26, %c0_27] : memref<7x32x4xf32, #tpu.memory_space<vmem>>, vector<1x32x4xf32>
    %62 = vector.shape_cast %61 : vector<1x32x4xf32> to vector<32x4xf32>
    %63 = vector.extract_strided_slice %42 {offsets = [0, 128], sizes = [4, 128], strides = [1, 1]} : vector<4x384xf32> to vector<4x128xf32>
    %cst_28 = arith.constant dense<0.000000e+00> : vector<32x128xf32>
    %64 = tpu.matmul %62, %63, %cst_28 {dimension_numbers = #tpu.dot_dimension_numbers<[1], [0], [0], [1], [0, 0, 1, 1], [], []>} : vector<32x4xf32>, vector<4x128xf32>, vector<32x128xf32> -> vector<32x128xf32>
    %65 = arith.addf %60, %64 : vector<32x128xf32>
    %c4 = arith.constant 4 : index
    %c0_29 = arith.constant 0 : index
    %c0_30 = arith.constant 0 : index
    %66 = vector.load %arg5[%c4, %c0_29, %c0_30] : memref<7x32x4xf32, #tpu.memory_space<vmem>>, vector<1x32x4xf32>
    %67 = vector.shape_cast %66 : vector<1x32x4xf32> to vector<32x4xf32>
    %68 = vector.extract_strided_slice %42 {offsets = [0, 129], sizes = [4, 128], strides = [1, 1]} : vector<4x384xf32> to vector<4x128xf32>
    %cst_31 = arith.constant dense<0.000000e+00> : vector<32x128xf32>
    %69 = tpu.matmul %67, %68, %cst_31 {dimension_numbers = #tpu.dot_dimension_numbers<[1], [0], [0], [1], [0, 0, 1, 1], [], []>} : vector<32x4xf32>, vector<4x128xf32>, vector<32x128xf32> -> vector<32x128xf32>
    %70 = arith.addf %65, %69 : vector<32x128xf32>
    %c5 = arith.constant 5 : index
    %c0_32 = arith.constant 0 : index
    %c0_33 = arith.constant 0 : index
    %71 = vector.load %arg5[%c5, %c0_32, %c0_33] : memref<7x32x4xf32, #tpu.memory_space<vmem>>, vector<1x32x4xf32>
    %72 = vector.shape_cast %71 : vector<1x32x4xf32> to vector<32x4xf32>
    %73 = vector.extract_strided_slice %42 {offsets = [0, 130], sizes = [4, 128], strides = [1, 1]} : vector<4x384xf32> to vector<4x128xf32>
    %cst_34 = arith.constant dense<0.000000e+00> : vector<32x128xf32>
    %74 = tpu.matmul %72, %73, %cst_34 {dimension_numbers = #tpu.dot_dimension_numbers<[1], [0], [0], [1], [0, 0, 1, 1], [], []>} : vector<32x4xf32>, vector<4x128xf32>, vector<32x128xf32> -> vector<32x128xf32>
    %75 = arith.addf %70, %74 : vector<32x128xf32>
    %c6 = arith.constant 6 : index
    %c0_35 = arith.constant 0 : index
    %c0_36 = arith.constant 0 : index
    %76 = vector.load %arg5[%c6, %c0_35, %c0_36] : memref<7x32x4xf32, #tpu.memory_space<vmem>>, vector<1x32x4xf32>
    %77 = vector.shape_cast %76 : vector<1x32x4xf32> to vector<32x4xf32>
    %78 = vector.extract_strided_slice %42 {offsets = [0, 131], sizes = [4, 128], strides = [1, 1]} : vector<4x384xf32> to vector<4x128xf32>
    %cst_37 = arith.constant dense<0.000000e+00> : vector<32x128xf32>
    %79 = tpu.matmul %77, %78, %cst_37 {dimension_numbers = #tpu.dot_dimension_numbers<[1], [0], [0], [1], [0, 0, 1, 1], [], []>} : vector<32x4xf32>, vector<4x128xf32>, vector<32x128xf32> -> vector<32x128xf32>
    %80 = arith.addf %75, %79 : vector<32x128xf32>
    %c0_38 = arith.constant 0 : index
    %c0_39 = arith.constant 0 : index
    %c0_40 = arith.constant 0 : index
    %81 = vector.load %arg7[%c0_38, %c0_39, %c0_40] : memref<1x32x128xf32, #tpu.memory_space<vmem>>, vector<1x32x128xf32>
    %82 = vector.shape_cast %81 : vector<1x32x128xf32> to vector<32x128xf32>
    %83 = vector.shape_cast %80 : vector<32x128xf32> to vector<1x32x128xf32>
    tpu.vector_store %arg7[%c0_38, %c0_39, %c0_40], %83 {strides = array<i32>} : memref<1x32x128xf32, #tpu.memory_space<vmem>>, vector<1x32x128xf32>,
    return
  }
  func.func @transform_0(%arg0: i32, %arg1: i32) -> (i32, i32, i32) {
    %c1_i32 = arith.constant 1 : i32
    %0 = arith.muli %arg1, %c1_i32 : i32
    %c1_i32_0 = arith.constant 1 : i32
    %1 = arith.subi %0, %c1_i32_0 : i32
    %c0_i32 = arith.constant 0 : i32
    %2 = arith.maxsi %1, %c0_i32 : i32
    %c0_i32_1 = arith.constant 0 : i32
    %c0_i32_2 = arith.constant 0 : i32
    return %arg0, %c0_i32_1, %2 : i32, i32, i32
  }
  func.func @transform_1(%arg0: i32, %arg1: i32) -> (i32, i32, i32) {
    %c0_i32 = arith.constant 0 : i32
    %c0_i32_0 = arith.constant 0 : i32
    return %arg0, %c0_i32, %arg1 : i32, i32, i32
  }
  func.func @transform_2(%arg0: i32, %arg1: i32) -> (i32, i32, i32) {
    %c1_i32 = arith.constant 1 : i32
    %0 = arith.addi %arg1, %c1_i32 : i32
    %c1_i32_0 = arith.constant 1 : i32
    %1 = arith.muli %0, %c1_i32_0 : i32
    %c0_i32 = arith.constant 0 : i32
    %2 = arith.minsi %1, %c0_i32 : i32
    %c0_i32_1 = arith.constant 0 : i32
    %c0_i32_2 = arith.constant 0 : i32
    return %arg0, %c0_i32_1, %2 : i32, i32, i32
  }
  func.func @transform_3(%arg0: i32, %arg1: i32) -> (i32, i32, i32) {
    %c0_i32 = arith.constant 0 : i32
    %c0_i32_0 = arith.constant 0 : i32
    %c0_i32_1 = arith.constant 0 : i32
    %c0_i32_2 = arith.constant 0 : i32
    return %c0_i32, %c0_i32_0, %c0_i32_1 : i32, i32, i32
  }
  func.func @transform_4(%arg0: i32, %arg1: i32) -> (i32, i32) {
    %c0_i32 = arith.constant 0 : i32
    %c0_i32_0 = arith.constant 0 : i32
    %c0_i32_1 = arith.constant 0 : i32
    return %c0_i32, %c0_i32_0 : i32, i32
  }
  func.func @transform_5(%arg0: i32, %arg1: i32) -> (i32, i32, i32) {
    %c0_i32 = arith.constant 0 : i32
    %c0_i32_0 = arith.constant 0 : i32
    return %arg0, %c0_i32, %arg1 : i32, i32, i32
  }
}

</mosaic_0001>

<llo_original>
// kernel: tpu_custom_call.1
$region0: #{tpu_custom_call.1}
  #allocation0 [shape = 'u32[]', space=smem, size = 0x4, offset = 0x4, fixed_abs, tag = 'smem constant byte address 0x4 - core index']
  #allocation1 [shape = 'u32[144,128]{1,0:T(1,128)}', space=vmem, size = 0x12000, scoped, tag = 'internal scratch']
  %s0 = inlined_call_operand.vmem [shape: f32[2,4,16], index: 0, kind: input, shape index: {}]
  %s1 = inlined_call_operand.vmem [shape: f32[2,4,16], index: 1, kind: input, shape index: {}]
  %s2 = inlined_call_operand.vmem [shape: f32[2,4,16], index: 2, kind: input, shape index: {}]
  %s3 = inlined_call_operand.vmem [shape: f32[7,32,4], index: 3, kind: input, shape index: {}]
  %s4 = inlined_call_operand.vmem [shape: f32[32,1], index: 4, kind: input, shape index: {}]
  %s5 = inlined_call_operand.vmem [shape: f32[2,32,16], index: 5, kind: output, shape index: {}]
  %s6 = sld [smem:[#allocation0]]
  $region53: #{tpu_custom_call.1} parent=0
    _
  %s8 = ssub.s32 1, %s6
  %s9 = scalar_select 0, %s8, %s6
  loop: start=0, step=1, limit=4
  $region2: #{tpu_custom_call.1} parent=0 // loop_pre_header
    _
  $region3: #{tpu_custom_call.1} parent=0 // loop_header
    %s11 = sphi 0, %s15
    %p12 = scmp.ge.s32.totalorder %s11, 4
    %s18 = sphi 0, %s30
    %s19 = sphi 0, %s26
    %s20 = sphi 0, %s18
    %s21 = sphi 0, %s19
    %s22 = sphi 0, %s20
    %s23 = sphi 0, %s21
    %s41 = sphi 0, %s43
    %s44 = sphi 0, %s41
    %s45 = sphi 0, %s44
    %s61 = sphi 0, %s45
    %s69 = sphi 0, %s71
    %s72 = sphi 0, %s69
    %s73 = sphi 0, %s72
    %s89 = sphi 0, %s73
    %s103 = sphi 0, %s105
    %s106 = sphi 0, %s103
    %s107 = sphi 0, %s106
    %s123 = sphi 0, %s107
    %s127 = sphi 0, %s127
    %s129 = sphi 0, %s127
    %s130 = sphi 0, %s129
    %s144 = sphi 0, %s130
    %s148 = sphi 0, %s148
    %s150 = sphi 0, %s148
    %s151 = sphi 0, %s150
    %s165 = sphi 0, %s151
    %s173 = sphi 0, %s175
    %s176 = sphi 0, %s173
    %s177 = sphi 0, %s176
    %s193 = sphi 0, %s177
  $region4: #{tpu_custom_call.1} parent=0 // loop_header_branch
    %14 = sbr.rel (%p12) target = $region8
  $region5: #{tpu_custom_call.1} parent=0 // loop_body
    %s16 = ssub.s32 %s11, 1
    %s17 = ssub.s32 %s11, 2
    %s24 = sadd.s32 1, %s19
    %p25 = scmp.ge.s32.totalorder %s24, 1
    %s26 = scalar_select %p25, 0, %s24
    %s27 = sadd.s32 1, %s18
    %s28 = scalar_select %p25, %s27, %s18
    %p29 = scmp.ge.s32.totalorder %s28, 2
    %s30 = scalar_select %p29, 0, %s28
    %s31 = ssub.s32 %s19, 1
    %p32 = scmp.gt.s32.totalorder %s31, 0
    %s33 = scalar_select %p32, %s31, 0
    %s34 = ssub.s32 %s26, 1
    %p35 = scmp.gt.s32.totalorder %s34, 0
    %s36 = scalar_select %p35, %s34, 0
    %s37 = ssub.s32 %s18, %s30
    %s38 = ssub.s32 %s33, %s36
    %s39 = sor.u32 %s37, %s38
    %p40 = scmp.eq.s32.totalorder %s39, 0
    %s42 = sadd.s32 %s41, 1
    %s43 = scalar_select %p40, %s41, %s42
    %p46 = pneg %p40
    %p47 = scmp.eq.s32.totalorder %s11, 1
    %p48 = por %p46, %p47
    %p49 = scmp.ne.s32.totalorder %s41, %s44
    %p50 = scmp.eq.s32.totalorder %s11, 0
    %p51 = por %p49, %p50
    %p52 = scmp.ne.s32.totalorder %s41, %s44
    %p53 = scmp.eq.s32.totalorder %s16, 1
    %p54 = por %p52, %p53
    %p55 = scmp.ne.s32.totalorder %s44, %s45
    %p56 = scmp.eq.s32.totalorder %s16, 0
    %p57 = por %p55, %p56
    %p58 = scmp.ne.s32.totalorder %s44, %s45
    %p59 = scmp.eq.s32.totalorder %s17, 1
    %p60 = por %p58, %p59
    %p62 = scmp.ne.s32.totalorder %s45, %s61
    %p63 = scmp.eq.s32.totalorder %s17, 0
    %p64 = por %p62, %p63
    %s65 = ssub.s32 %s18, %s30
    %s66 = ssub.s32 %s19, %s26
    %s67 = sor.u32 %s65, %s66
    %p68 = scmp.eq.s32.totalorder %s67, 0
    %s70 = sadd.s32 %s69, 1
    %s71 = scalar_select %p68, %s69, %s70
    %p74 = pneg %p68
    %p75 = scmp.eq.s32.totalorder %s11, 1
    %p76 = por %p74, %p75
    %p77 = scmp.ne.s32.totalorder %s69, %s72
    %p78 = scmp.eq.s32.totalorder %s11, 0
    %p79 = por %p77, %p78
    %p80 = scmp.ne.s32.totalorder %s69, %s72
    %p81 = scmp.eq.s32.totalorder %s16, 1
    %p82 = por %p80, %p81
    %p83 = scmp.ne.s32.totalorder %s72, %s73
    %p84 = scmp.eq.s32.totalorder %s16, 0
    %p85 = por %p83, %p84
    %p86 = scmp.ne.s32.totalorder %s72, %s73
    %p87 = scmp.eq.s32.totalorder %s17, 1
    %p88 = por %p86, %p87
    %p90 = scmp.ne.s32.totalorder %s73, %s89
    %p91 = scmp.eq.s32.totalorder %s17, 0
    %p92 = por %p90, %p91
    %s93 = sadd.s32 %s19, 1
    %p94 = scmp.lt.s32.totalorder %s93, 0
    %s95 = scalar_select %p94, %s93, 0
    %s96 = sadd.s32 %s26, 1
    %p97 = scmp.lt.s32.totalorder %s96, 0
    %s98 = scalar_select %p97, %s96, 0
    %s99 = ssub.s32 %s18, %s30
    %s100 = ssub.s32 %s95, %s98
    %s101 = sor.u32 %s99, %s100
    %p102 = scmp.eq.s32.totalorder %s101, 0
    %s104 = sadd.s32 %s103, 1
    %s105 = scalar_select %p102, %s103, %s104
    %p108 = pneg %p102
    %p109 = scmp.eq.s32.totalorder %s11, 1
    %p110 = por %p108, %p109
    %p111 = scmp.ne.s32.totalorder %s103, %s106
    %p112 = scmp.eq.s32.totalorder %s11, 0
    %p113 = por %p111, %p112
    %p114 = scmp.ne.s32.totalorder %s103, %s106
    %p115 = scmp.eq.s32.totalorder %s16, 1
    %p116 = por %p114, %p115
    %p117 = scmp.ne.s32.totalorder %s106, %s107
    %p118 = scmp.eq.s32.totalorder %s16, 0
    %p119 = por %p117, %p118
    %p120 = scmp.ne.s32.totalorder %s106, %s107
    %p121 = scmp.eq.s32.totalorder %s17, 1
    %p122 = por %p120, %p121
    %p124 = scmp.ne.s32.totalorder %s107, %s123
    %p125 = scmp.eq.s32.totalorder %s17, 0
    %p126 = por %p124, %p125
    %s128 = sadd.s32 %s127, 1
    %p131 = scmp.eq.s32.totalorder %s11, 1
    %p132 = scmp.ne.s32.totalorder %s127, %s129
    %p133 = scmp.eq.s32.totalorder %s11, 0
    %p134 = por %p132, %p133
    %p135 = scmp.ne.s32.totalorder %s127, %s129
    %p136 = scmp.eq.s32.totalorder %s16, 1
    %p137 = por %p135, %p136
    %p138 = scmp.ne.s32.totalorder %s129, %s130
    %p139 = scmp.eq.s32.totalorder %s16, 0
    %p140 = por %p138, %p139
    %p141 = scmp.ne.s32.totalorder %s129, %s130
    %p142 = scmp.eq.s32.totalorder %s17, 1
    %p143 = por %p141, %p142
    %p145 = scmp.ne.s32.totalorder %s130, %s144
    %p146 = scmp.eq.s32.totalorder %s17, 0
    %p147 = por %p145, %p146
    %s149 = sadd.s32 %s148, 1
    %p152 = scmp.eq.s32.totalorder %s11, 1
    %p153 = scmp.ne.s32.totalorder %s148, %s150
    %p154 = scmp.eq.s32.totalorder %s11, 0
    %p155 = por %p153, %p154
    %p156 = scmp.ne.s32.totalorder %s148, %s150
    %p157 = scmp.eq.s32.totalorder %s16, 1
    %p158 = por %p156, %p157
    %p159 = scmp.ne.s32.totalorder %s150, %s151
    %p160 = scmp.eq.s32.totalorder %s16, 0
    %p161 = por %p159, %p160
    %p162 = scmp.ne.s32.totalorder %s150, %s151
    %p163 = scmp.eq.s32.totalorder %s17, 1
    %p164 = por %p162, %p163
    %p166 = scmp.ne.s32.totalorder %s151, %s165
    %p167 = scmp.eq.s32.totalorder %s17, 0
    %p168 = por %p166, %p167
    %s169 = ssub.s32 %s18, %s30
    %s170 = ssub.s32 %s19, %s26
    %s171 = sor.u32 %s169, %s170
    %p172 = scmp.eq.s32.totalorder %s171, 0
    %s174 = sadd.s32 %s173, 1
    %s175 = scalar_select %p172, %s173, %s174
    %p178 = pneg %p172
    %p179 = scmp.eq.s32.totalorder %s11, 1
    %p180 = por %p178, %p179
    %p181 = scmp.ne.s32.totalorder %s173, %s176
    %p182 = scmp.eq.s32.totalorder %s11, 0
    %p183 = por %p181, %p182
    %p184 = scmp.ne.s32.totalorder %s173, %s176
    %p185 = scmp.eq.s32.totalorder %s16, 1
    %p186 = por %p184, %p185
    %p187 = scmp.ne.s32.totalorder %s176, %s177
    %p188 = scmp.eq.s32.totalorder %s16, 0
    %p189 = por %p187, %p188
    %p190 = scmp.ne.s32.totalorder %s176, %s177
    %p191 = scmp.eq.s32.totalorder %s17, 1
    %p192 = por %p190, %p191
    %p194 = scmp.ne.s32.totalorder %s177, %s193
    %p195 = scmp.eq.s32.totalorder %s17, 0
    %p196 = por %p194, %p195
    %p197 = scmp.le.s32.totalorder 1, %s11
    %p198 = scmp.lt.s32.totalorder %s11, 3
    %p199 = pnand %p197, %p198
    %p200 = pneg %p199
    // Predicated region
    $region9: #{tpu_custom_call.1} parent=5 // pred_check
      _
    $region10: #{tpu_custom_call.1} parent=5 // pred_check_branch
      %202 = sbr.rel (%p199) target = $region12
    $region11: #{tpu_custom_call.1} parent=5 // pred_region
      %s203 = ssub.s32 %s11, 1
      // Predicated region
      $region13: #{tpu_custom_call.1} parent=11 // pred_check
        %p204 = pneg %p140
      $region14: #{tpu_custom_call.1} parent=11 // pred_check_branch
        %206 = sbr.rel (%p204) target = $region16
      $region15: #{tpu_custom_call.1} parent=11 // pred_region
        _
      $region16: #{tpu_custom_call.1} parent=11 // pred_fallthru
        _
      // Predicated region
      $region17: #{tpu_custom_call.1} parent=11 // pred_check
        %p207 = pneg %p161
      $region18: #{tpu_custom_call.1} parent=11 // pred_check_branch
        %209 = sbr.rel (%p207) target = $region20
      $region19: #{tpu_custom_call.1} parent=11 // pred_region
        _
      $region20: #{tpu_custom_call.1} parent=11 // pred_fallthru
        _
    $region12: #{tpu_custom_call.1} parent=5 // pred_fallthru
      _
    %p210 = scmp.lt.s32.totalorder %s11, 2
    // Predicated region
    $region21: #{tpu_custom_call.1} parent=5 // pred_check
      %p211 = pneg %p210
    $region22: #{tpu_custom_call.1} parent=5 // pred_check_branch
      %213 = sbr.rel (%p211) target = $region24
    $region23: #{tpu_custom_call.1} parent=5 // pred_region
      // Predicated region
      $region25: #{tpu_custom_call.1} parent=23 // pred_check
        %p214 = pneg %p51
      $region26: #{tpu_custom_call.1} parent=23 // pred_check_branch
        %216 = sbr.rel (%p214) target = $region28
      $region27: #{tpu_custom_call.1} parent=23 // pred_region
        %s217 = ssub.s32 %s19, 1
        %p218 = scmp.gt.s32.totalorder %s217, 0
        %s219 = scalar_select %p218, %s217, 0
        %p220 = scmp.lt.s32.totalorder %s18, 1
        %s221 = scalar_select %p220, %s18, 1
        %p222 = scmp.lt.s32.totalorder %s219, 0
        %s223 = scalar_select %p222, %s219, 0
        %s224 = sadd.s32 %s223, %s221
        %s225 = smul.addr %s224, 4
        %s226 = scalar_lea.vmem %s0, %s225
        %s227 = ssub.s32 %s19, 1
        %p228 = scmp.gt.s32.totalorder %s227, 0
        %s229 = scalar_select %p228, %s227, 0
      $region28: #{tpu_custom_call.1} parent=23 // pred_fallthru
        _
      // Predicated region
      $region29: #{tpu_custom_call.1} parent=23 // pred_check
        %p230 = pneg %p79
      $region30: #{tpu_custom_call.1} parent=23 // pred_check_branch
        %232 = sbr.rel (%p230) target = $region32
      $region31: #{tpu_custom_call.1} parent=23 // pred_region
        %p233 = scmp.lt.s32.totalorder %s18, 1
        %s234 = scalar_select %p233, %s18, 1
        %p235 = scmp.lt.s32.totalorder %s19, 0
        %s236 = scalar_select %p235, %s19, 0
        %s237 = sadd.s32 %s236, %s234
        %s238 = smul.addr %s237, 4
        %s239 = scalar_lea.vmem %s1, %s238
      $region32: #{tpu_custom_call.1} parent=23 // pred_fallthru
        _
      // Predicated region
      $region33: #{tpu_custom_call.1} parent=23 // pred_check
        %p240 = pneg %p113
      $region34: #{tpu_custom_call.1} parent=23 // pred_check_branch
        %242 = sbr.rel (%p240) target = $region36
      $region35: #{tpu_custom_call.1} parent=23 // pred_region
        %s243 = sadd.s32 %s19, 1
        %p244 = scmp.lt.s32.totalorder %s243, 0
        %s245 = scalar_select %p244, %s243, 0
        %p246 = scmp.lt.s32.totalorder %s18, 1
        %s247 = scalar_select %p246, %s18, 1
        %p248 = scmp.lt.s32.totalorder %s245, 0
        %s249 = scalar_select %p248, %s245, 0
        %s250 = sadd.s32 %s249, %s247
        %s251 = smul.addr %s250, 4
        %s252 = scalar_lea.vmem %s2, %s251
        %s253 = sadd.s32 %s19, 1
        %p254 = scmp.lt.s32.totalorder %s253, 0
        %s255 = scalar_select %p254, %s253, 0
      $region36: #{tpu_custom_call.1} parent=23 // pred_fallthru
        _
    $region24: #{tpu_custom_call.1} parent=5 // pred_fallthru
      _
    %p256 = scmp.le.s32.totalorder 1, %s11
    %p257 = scmp.lt.s32.totalorder %s11, 3
    %p258 = pnand %p256, %p257
    %p259 = pneg %p258
    // Predicated region
    $region37: #{tpu_custom_call.1} parent=5 // pred_check
      _
    $region38: #{tpu_custom_call.1} parent=5 // pred_check_branch
      %261 = sbr.rel (%p258) target = $region40
    $region39: #{tpu_custom_call.1} parent=5 // pred_region
      %s262 = ssub.s32 %s11, 1
      %s263 = ssub.s32 %s21, 1
      %p264 = scmp.gt.s32.totalorder %s263, 0
      %s265 = scalar_select %p264, %s263, 0
      %p266 = scmp.lt.s32.totalorder %s20, 1
      %s267 = scalar_select %p266, %s20, 1
      %p268 = scmp.lt.s32.totalorder %s265, 0
      %s269 = scalar_select %p268, %s265, 0
      %s270 = sadd.s32 %s269, %s267
      %s271 = smul.addr %s270, 4
      %s272 = scalar_lea.vmem %s0, %s271
      %p273 = pneg %p57
      %p274 = pneg %p54
      %p275 = scmp.lt.s32.totalorder %s20, 1
      %s276 = scalar_select %p275, %s20, 1
      %p277 = scmp.lt.s32.totalorder %s21, 0
      %s278 = scalar_select %p277, %s21, 0
      %s279 = sadd.s32 %s278, %s276
      %s280 = smul.addr %s279, 4
      %s281 = scalar_lea.vmem %s1, %s280
      %p282 = pneg %p85
      %p283 = pneg %p82
      %s284 = sadd.s32 %s21, 1
      %p285 = scmp.lt.s32.totalorder %s284, 0
      %s286 = scalar_select %p285, %s284, 0
      %p287 = scmp.lt.s32.totalorder %s20, 1
      %s288 = scalar_select %p287, %s20, 1
      %p289 = scmp.lt.s32.totalorder %s286, 0
      %s290 = scalar_select %p289, %s286, 0
      %s291 = sadd.s32 %s290, %s288
      %s292 = smul.addr %s291, 4
      %s293 = scalar_lea.vmem %s2, %s292
      %p294 = pneg %p119
      %p295 = pneg %p116
      %p296 = pneg %p140
      %p297 = pneg %p137
      %p298 = pneg %p161
      %p299 = pneg %p158
      %p300 = pneg %p189
      %p301 = pneg %p186
      %p302 = scmp.lt.s32.totalorder %s20, 1
      %s303 = scalar_select %p302, %s20, 1
      %p304 = scmp.lt.s32.totalorder %s21, 0
      %s305 = scalar_select %p304, %s21, 0
      %s306 = smul.addr %s303, 4
      %s307 = sadd.s32 %s305, %s306
      %s308 = smul.addr %s307, 8
      %s309 = scalar_lea.vmem %s5, %s308
      %s310 = ssub.s32 %s21, 1
      %p311 = scmp.gt.s32.totalorder %s310, 0
      %s312 = scalar_select %p311, %s310, 0
      %p313 = scmp.lt.s32.totalorder %s20, 1
      %s314 = scalar_select %p313, %s20, 1
      %p315 = scmp.lt.s32.totalorder %s312, 0
      %s316 = scalar_select %p315, %s312, 0
      %s317 = sadd.s32 %s316, %s314
      %s318 = smul.addr %s317, 4
      %s319 = scalar_lea.vmem %s0, %s318
      %s320 = ssub.s32 %s21, 1
      %p321 = scmp.gt.s32.totalorder %s320, 0
      %s322 = scalar_select %p321, %s320, 0
      %p323 = scmp.lt.s32.totalorder %s20, 1
      %s324 = scalar_select %p323, %s20, 1
      %p325 = scmp.lt.s32.totalorder %s21, 0
      %s326 = scalar_select %p325, %s21, 0
      %s327 = sadd.s32 %s326, %s324
      %s328 = smul.addr %s327, 4
      %s329 = scalar_lea.vmem %s1, %s328
      %s330 = sadd.s32 %s21, 1
      %p331 = scmp.lt.s32.totalorder %s330, 0
      %s332 = scalar_select %p331, %s330, 0
      %p333 = scmp.lt.s32.totalorder %s20, 1
      %s334 = scalar_select %p333, %s20, 1
      %p335 = scmp.lt.s32.totalorder %s332, 0
      %s336 = scalar_select %p335, %s332, 0
      %s337 = sadd.s32 %s336, %s334
      %s338 = smul.addr %s337, 4
      %s339 = scalar_lea.vmem %s2, %s338
      %s340 = sadd.s32 %s21, 1
      %p341 = scmp.lt.s32.totalorder %s340, 0
      %s342 = scalar_select %p341, %s340, 0
      %p343 = scmp.lt.s32.totalorder %s20, 1
      %s344 = scalar_select %p343, %s20, 1
      %p345 = scmp.lt.s32.totalorder %s21, 0
      %s346 = scalar_select %p345, %s21, 0
      %s347 = smul.addr %s344, 4
      %s348 = sadd.s32 %s346, %s347
      %s349 = smul.addr %s348, 8
      %s350 = scalar_lea.vmem %s5, %s349
      %s351 = smul.u32 %s21, 128
      %v352 = vlaneseq
      %v353 = vand.u32 %v352, 127
      %s354 = ssub.s32 %s351, 128
      %v355 = vstv %s354
      %v356 = vadd.s32 %v353, %v355
      %v357 = vstv %s351
      %v358 = vadd.s32 %v353, %v357
      %s359 = sadd.s32 %s351, 128
      %v360 = vstv %s359
      %v361 = vadd.s32 %v353, %v360
      %vm362 = vcmp.ge.s32.totalorder %v356, 0
      %vm363 = vcmp.lt.s32.totalorder %v356, 16
      %vm364 = vmand %vm362, %vm363
      %v365 = vld [vmem:[%s319] sm:$0xf]
      %v366 = vsel %vm364, 1, 0
      %vm367 = vcmp.eq.s32.totalorder %v366, 1
      %v368 = vsel %vm367, %v365, 0.0
      %vm369 = vcmp.lt.s32.totalorder %v358, 16
      %v370 = vld [vmem:[%s329] sm:$0xf]
      %v371 = vsel %vm369, 1, 0
      %vm372 = vcmp.eq.s32.totalorder %v371, 1
      %v373 = vsel %vm372, %v370, 0.0
      %vm374 = vcmp.lt.s32.totalorder %v361, 16
      %v375 = vld [vmem:[%s339] sm:$0xf]
      %v376 = vsel %vm374, 1, 0
      %vm377 = vcmp.eq.s32.totalorder %v376, 1
      %v378 = vsel %vm377, %v375, 0.0
      %v379 = vld [vmem:[%s4] sm:$0xff]
      %v380 = vld [vmem:[%s4 + $0x8] sm:$0xff]
      %v381 = vld [vmem:[%s4 + $0x10] sm:$0xff]
      %v382 = vld [vmem:[%s4 + $0x18] sm:$0xff]
      %384 = vset.pattern.permute.xlu0 0
      %385 = vperm.xlu0 %384, %v379
      %v386 = vpop.permute.xlu0 %385
      %389 = vset.pattern.permute.xlu0 0
      %390 = vperm.xlu0 %389, %v380
      %v391 = vpop.permute.xlu0 %390
      %394 = vset.pattern.permute.xlu0 0
      %395 = vperm.xlu0 %394, %v381
      %v396 = vpop.permute.xlu0 %395
      %399 = vset.pattern.permute.xlu0 0
      %400 = vperm.xlu0 %399, %v382
      %v401 = vpop.permute.xlu0 %400
      %v403 = vld [vmem:[%s3] sm:$0xff]
      %v404 = vld [vmem:[%s3 + $0x8] sm:$0xff]
      %v405 = vld [vmem:[%s3 + $0x10] sm:$0xff]
      %v406 = vld [vmem:[%s3 + $0x18] sm:$0xff]
      %409 = vrot.lane.b32.xlu0 %v368, 3
      %v410 = vpop.permute.xlu0 %409
      %411 = vrot.lane.b32.xlu0 %v373, 3
      %v412 = vpop.permute.xlu0 %411
      %vm413 = vcmask 23552
      %v414 = vsel %vm413, %v410, %v412
      %vm415 = vcmask 31744
      %v417 = vsel %vm415, %v403, 0
      %v420 = vsel %vm415, %v404, 0
      %v423 = vsel %vm415, %v405, 0
      %v426 = vsel %vm415, %v406, 0
      %vm428 = vcmask 1043456
      %v429 = vsel %vm428, %v414, 0
      %431 = vmatprep.subr.mxu0 0.0
      %432 = vmatpush1.msra.mxu0 %v429
      %433 = vmatprep.subr.mxu0 0.0
      %434 = vmatpush1.msra.mxu0 0.0
      %435 = vmatprep.subr.mxu0 0.0
      %436 = vmatpush1.msra.mxu0 0.0
      %437 = vmatprep.subr.mxu0 0.0
      %438 = vmatpush1.msra.mxu0 0.0
      %439 = vmatprep.subr.mxu0 0.0
      %440 = vmatpush1.msra.mxu0 0.0
      %441 = vmatprep.subr.mxu0 0.0
      %442 = vmatpush1.msra.mxu0 0.0
      %443 = vmatprep.subr.mxu0 0.0
      %444 = vmatpush1.msra.mxu0 0.0
      %445 = vmatprep.subr.mxu0 0.0
      %446 = vmatpush1.msra.mxu0 0.0
      %447 = vmatprep.subr.mxu0 0.0
      %448 = vmatpush1.msra.mxu0 0.0
      %449 = vmatprep.subr.mxu0 0.0
      %450 = vmatpush1.msra.mxu0 0.0
      %451 = vmatprep.subr.mxu0 0.0
      %452 = vmatpush1.msra.mxu0 0.0
      %453 = vmatprep.subr.mxu0 0.0
      %454 = vmatpush1.msra.mxu0 0.0
      %455 = vmatprep.subr.mxu0 0.0
      %456 = vmatpush1.msra.mxu0 0.0
      %457 = vmatprep.subr.mxu0 0.0
      %458 = vmatpush1.msra.mxu0 0.0
      %459 = vmatprep.subr.mxu0 0.0
      %460 = vmatpush1.msra.mxu0 0.0
      %461 = vmatprep.subr.mxu0 0.0
      %462 = vmatpush1.msra.mxu0 0.0
      %463 = vmatprep.subr.mxu0 0.0
      %464 = vmatpush1.msra.mxu0 0.0
      %465 = vmatprep.subr.mxu0 0.0
      %466 = vmatpush1.msra.mxu0 0.0
      %467 = vmatprep.subr.mxu0 0.0
      %468 = vmatpush1.msra.mxu0 0.0
      %469 = vmatprep.subr.mxu0 0.0
      %470 = vmatpush1.msra.mxu0 0.0
      %471 = vmatprep.subr.mxu0 0.0
      %472 = vmatpush1.msra.mxu0 0.0
      %473 = vmatprep.subr.mxu0 0.0
      %474 = vmatpush1.msra.mxu0 0.0
      %475 = vmatprep.subr.mxu0 0.0
      %476 = vmatpush1.msra.mxu0 0.0
      %477 = vmatprep.subr.mxu0 0.0
      %478 = vmatpush1.msra.mxu0 0.0
      %479 = vmatprep.subr.mxu0 0.0
      %480 = vmatpush1.msra.mxu0 0.0
      %481 = vmatprep.subr.mxu0 0.0
      %482 = vmatpush1.msra.mxu0 0.0
      %483 = vmatprep.subr.mxu0 0.0
      %484 = vmatpush1.msra.mxu0 0.0
      %485 = vmatprep.subr.mxu0 0.0
      %486 = vmatpush1.msra.mxu0 0.0
      %487 = vmatprep.subr.mxu0 0.0
      %488 = vmatpush1.msra.mxu0 0.0
      %489 = vmatprep.subr.mxu0 0.0
      %490 = vmatpush1.msra.mxu0 0.0
      %491 = vmatprep.subr.mxu0 0.0
      %492 = vmatpush1.msra.mxu0 0.0
      %493 = vmatprep.subr.mxu0 0.0
      %494 = vmatpush1.msra.mxu0 0.0
      %495 = vmatprep.mubr.f32.mxu0 0.0
      %496 = vmatmul.mubr.f32.gmra.mrb[0].mxu0 %v417
      %v497 = vpop.f32.mrb[0].mxu0
      %v498 = vadd.f32 0.0, %v497
      %v499 = vpop.f32.mrb[0].mxu0
      %500 = vmatprep.mubr.f32.mxu0 0.0
      %501 = vmatmul.mubr.f32.gmra.mrb[0].mxu0 %v420
      %v502 = vpop.f32.mrb[0].mxu0
      %v503 = vadd.f32 0.0, %v502
      %v504 = vpop.f32.mrb[0].mxu0
      %505 = vmatprep.mubr.f32.mxu0 0.0
      %506 = vmatmul.mubr.f32.gmra.mrb[0].mxu0 %v423
      %v507 = vpop.f32.mrb[0].mxu0
      %v508 = vadd.f32 0.0, %v507
      %v509 = vpop.f32.mrb[0].mxu0
      %510 = vmatprep.mubr.f32.mxu0 0.0
      %511 = vmatmul.mubr.f32.gmra.mrb[0].mxu0 %v426
      %v512 = vpop.f32.mrb[0].mxu0
      %v513 = vadd.f32 0.0, %v512
      %v514 = vpop.f32.mrb[0].mxu0
      %515 = vdwg.mxu0
      %v516 = vadd.f32 %v386, %v498
      %v517 = vadd.f32 %v391, %v503
      %v518 = vadd.f32 %v396, %v508
      %v519 = vadd.f32 %v401, %v513
      %s520 = scalar_lea.vmem %s3, 32
      %v521 = vld [vmem:[%s520] sm:$0xff]
      %v522 = vld [vmem:[%s520 + $0x8] sm:$0xff]
      %v523 = vld [vmem:[%s520 + $0x10] sm:$0xff]
      %v524 = vld [vmem:[%s520 + $0x18] sm:$0xff]
      %525 = vrot.lane.b32.xlu0 %v368, 2
      %v526 = vpop.permute.xlu0 %525
      %527 = vrot.lane.b32.xlu0 %v373, 2
      %v528 = vpop.permute.xlu0 %527
      %vm529 = vcmask 15360
      %v530 = vsel %vm529, %v526, %v528
      %v532 = vsel %vm415, %v521, 0
      %v535 = vsel %vm415, %v522, 0
      %v538 = vsel %vm415, %v523, 0
      %v541 = vsel %vm415, %v524, 0
      %v543 = vsel %vm428, %v530, 0
      %545 = vmatprep.subr.mxu0 0.0
      %546 = vmatpush1.msra.mxu0 %v543
      %547 = vmatprep.subr.mxu0 0.0
      %548 = vmatpush1.msra.mxu0 0.0
      %549 = vmatprep.subr.mxu0 0.0
      %550 = vmatpush1.msra.mxu0 0.0
      %551 = vmatprep.subr.mxu0 0.0
      %552 = vmatpush1.msra.mxu0 0.0
      %553 = vmatprep.subr.mxu0 0.0
      %554 = vmatpush1.msra.mxu0 0.0
      %555 = vmatprep.subr.mxu0 0.0
      %556 = vmatpush1.msra.mxu0 0.0
      %557 = vmatprep.subr.mxu0 0.0
      %558 = vmatpush1.msra.mxu0 0.0
      %559 = vmatprep.subr.mxu0 0.0
      %560 = vmatpush1.msra.mxu0 0.0
      %561 = vmatprep.subr.mxu0 0.0
      %562 = vmatpush1.msra.mxu0 0.0
      %563 = vmatprep.subr.mxu0 0.0
      %564 = vmatpush1.msra.mxu0 0.0
      %565 = vmatprep.subr.mxu0 0.0
      %566 = vmatpush1.msra.mxu0 0.0
      %567 = vmatprep.subr.mxu0 0.0
      %568 = vmatpush1.msra.mxu0 0.0
      %569 = vmatprep.subr.mxu0 0.0
      %570 = vmatpush1.msra.mxu0 0.0
      %571 = vmatprep.subr.mxu0 0.0
      %572 = vmatpush1.msra.mxu0 0.0
      %573 = vmatprep.subr.mxu0 0.0
      %574 = vmatpush1.msra.mxu0 0.0
      %575 = vmatprep.subr.mxu0 0.0
      %576 = vmatpush1.msra.mxu0 0.0
      %577 = vmatprep.subr.mxu0 0.0
      %578 = vmatpush1.msra.mxu0 0.0
      %579 = vmatprep.subr.mxu0 0.0
      %580 = vmatpush1.msra.mxu0 0.0
      %581 = vmatprep.subr.mxu0 0.0
      %582 = vmatpush1.msra.mxu0 0.0
      %583 = vmatprep.subr.mxu0 0.0
      %584 = vmatpush1.msra.mxu0 0.0
      %585 = vmatprep.subr.mxu0 0.0
      %586 = vmatpush1.msra.mxu0 0.0
      %587 = vmatprep.subr.mxu0 0.0
      %588 = vmatpush1.msra.mxu0 0.0
      %589 = vmatprep.subr.mxu0 0.0
      %590 = vmatpush1.msra.mxu0 0.0
      %591 = vmatprep.subr.mxu0 0.0
      %592 = vmatpush1.msra.mxu0 0.0
      %593 = vmatprep.subr.mxu0 0.0
      %594 = vmatpush1.msra.mxu0 0.0
      %595 = vmatprep.subr.mxu0 0.0
      %596 = vmatpush1.msra.mxu0 0.0
      %597 = vmatprep.subr.mxu0 0.0
      %598 = vmatpush1.msra.mxu0 0.0
      %599 = vmatprep.subr.mxu0 0.0
      %600 = vmatpush1.msra.mxu0 0.0
      %601 = vmatprep.subr.mxu0 0.0
      %602 = vmatpush1.msra.mxu0 0.0
      %603 = vmatprep.subr.mxu0 0.0
      %604 = vmatpush1.msra.mxu0 0.0
      %605 = vmatprep.subr.mxu0 0.0
      %606 = vmatpush1.msra.mxu0 0.0
      %607 = vmatprep.subr.mxu0 0.0
      %608 = vmatpush1.msra.mxu0 0.0
      %609 = vmatprep.mubr.f32.mxu0 0.0
      %610 = vmatmul.mubr.f32.gmra.mrb[0].mxu0 %v532
      %v611 = vpop.f32.mrb[0].mxu0
      %v612 = vadd.f32 0.0, %v611
      %v613 = vpop.f32.mrb[0].mxu0
      %614 = vmatprep.mubr.f32.mxu0 0.0
      %615 = vmatmul.mubr.f32.gmra.mrb[0].mxu0 %v535
      %v616 = vpop.f32.mrb[0].mxu0
      %v617 = vadd.f32 0.0, %v616
      %v618 = vpop.f32.mrb[0].mxu0
      %619 = vmatprep.mubr.f32.mxu0 0.0
      %620 = vmatmul.mubr.f32.gmra.mrb[0].mxu0 %v538
      %v621 = vpop.f32.mrb[0].mxu0
      %v622 = vadd.f32 0.0, %v621
      %v623 = vpop.f32.mrb[0].mxu0
      %624 = vmatprep.mubr.f32.mxu0 0.0
      %625 = vmatmul.mubr.f32.gmra.mrb[0].mxu0 %v541
      %v626 = vpop.f32.mrb[0].mxu0
      %v627 = vadd.f32 0.0, %v626
      %v628 = vpop.f32.mrb[0].mxu0
      %629 = vdwg.mxu0
      %v630 = vadd.f32 %v516, %v612
      %v631 = vadd.f32 %v517, %v617
      %v632 = vadd.f32 %v518, %v622
      %v633 = vadd.f32 %v519, %v627
      %s634 = scalar_lea.vmem %s3, 64
      %v635 = vld [vmem:[%s634] sm:$0xff]
      %v636 = vld [vmem:[%s634 + $0x8] sm:$0xff]
      %v637 = vld [vmem:[%s634 + $0x10] sm:$0xff]
      %v638 = vld [vmem:[%s634 + $0x18] sm:$0xff]
      %639 = vrot.lane.b32.xlu0 %v368, 1
      %v640 = vpop.permute.xlu0 %639
      %641 = vrot.lane.b32.xlu0 %v373, 1
      %v642 = vpop.permute.xlu0 %641
      %vm643 = vcmask 7168
      %v644 = vsel %vm643, %v640, %v642
      %v646 = vsel %vm415, %v635, 0
      %v649 = vsel %vm415, %v636, 0
      %v652 = vsel %vm415, %v637, 0
      %v655 = vsel %vm415, %v638, 0
      %v657 = vsel %vm428, %v644, 0
      %659 = vmatprep.subr.mxu0 0.0
      %660 = vmatpush1.msra.mxu0 %v657
      %661 = vmatprep.subr.mxu0 0.0
      %662 = vmatpush1.msra.mxu0 0.0
      %663 = vmatprep.subr.mxu0 0.0
      %664 = vmatpush1.msra.mxu0 0.0
      %665 = vmatprep.subr.mxu0 0.0
      %666 = vmatpush1.msra.mxu0 0.0
      %667 = vmatprep.subr.mxu0 0.0
      %668 = vmatpush1.msra.mxu0 0.0
      %669 = vmatprep.subr.mxu0 0.0
      %670 = vmatpush1.msra.mxu0 0.0
      %671 = vmatprep.subr.mxu0 0.0
      %672 = vmatpush1.msra.mxu0 0.0
      %673 = vmatprep.subr.mxu0 0.0
      %674 = vmatpush1.msra.mxu0 0.0
      %675 = vmatprep.subr.mxu0 0.0
      %676 = vmatpush1.msra.mxu0 0.0
      %677 = vmatprep.subr.mxu0 0.0
      %678 = vmatpush1.msra.mxu0 0.0
      %679 = vmatprep.subr.mxu0 0.0
      %680 = vmatpush1.msra.mxu0 0.0
      %681 = vmatprep.subr.mxu0 0.0
      %682 = vmatpush1.msra.mxu0 0.0
      %683 = vmatprep.subr.mxu0 0.0
      %684 = vmatpush1.msra.mxu0 0.0
      %685 = vmatprep.subr.mxu0 0.0
      %686 = vmatpush1.msra.mxu0 0.0
      %687 = vmatprep.subr.mxu0 0.0
      %688 = vmatpush1.msra.mxu0 0.0
      %689 = vmatprep.subr.mxu0 0.0
      %690 = vmatpush1.msra.mxu0 0.0
      %691 = vmatprep.subr.mxu0 0.0
      %692 = vmatpush1.msra.mxu0 0.0
      %693 = vmatprep.subr.mxu0 0.0
      %694 = vmatpush1.msra.mxu0 0.0
      %695 = vmatprep.subr.mxu0 0.0
      %696 = vmatpush1.msra.mxu0 0.0
      %697 = vmatprep.subr.mxu0 0.0
      %698 = vmatpush1.msra.mxu0 0.0
      %699 = vmatprep.subr.mxu0 0.0
      %700 = vmatpush1.msra.mxu0 0.0
      %701 = vmatprep.subr.mxu0 0.0
      %702 = vmatpush1.msra.mxu0 0.0
      %703 = vmatprep.subr.mxu0 0.0
      %704 = vmatpush1.msra.mxu0 0.0
      %705 = vmatprep.subr.mxu0 0.0
      %706 = vmatpush1.msra.mxu0 0.0
      %707 = vmatprep.subr.mxu0 0.0
      %708 = vmatpush1.msra.mxu0 0.0
      %709 = vmatprep.subr.mxu0 0.0
      %710 = vmatpush1.msra.mxu0 0.0
      %711 = vmatprep.subr.mxu0 0.0
      %712 = vmatpush1.msra.mxu0 0.0
      %713 = vmatprep.subr.mxu0 0.0
      %714 = vmatpush1.msra.mxu0 0.0
      %715 = vmatprep.subr.mxu0 0.0
      %716 = vmatpush1.msra.mxu0 0.0
      %717 = vmatprep.subr.mxu0 0.0
      %718 = vmatpush1.msra.mxu0 0.0
      %719 = vmatprep.subr.mxu0 0.0
      %720 = vmatpush1.msra.mxu0 0.0
      %721 = vmatprep.subr.mxu0 0.0
      %722 = vmatpush1.msra.mxu0 0.0
      %723 = vmatprep.mubr.f32.mxu0 0.0
      %724 = vmatmul.mubr.f32.gmra.mrb[0].mxu0 %v646
      %v725 = vpop.f32.mrb[0].mxu0
      %v726 = vadd.f32 0.0, %v725
      %v727 = vpop.f32.mrb[0].mxu0
      %728 = vmatprep.mubr.f32.mxu0 0.0
      %729 = vmatmul.mubr.f32.gmra.mrb[0].mxu0 %v649
      %v730 = vpop.f32.mrb[0].mxu0
      %v731 = vadd.f32 0.0, %v730
      %v732 = vpop.f32.mrb[0].mxu0
      %733 = vmatprep.mubr.f32.mxu0 0.0
      %734 = vmatmul.mubr.f32.gmra.mrb[0].mxu0 %v652
      %v735 = vpop.f32.mrb[0].mxu0
      %v736 = vadd.f32 0.0, %v735
      %v737 = vpop.f32.mrb[0].mxu0
      %738 = vmatprep.mubr.f32.mxu0 0.0
      %739 = vmatmul.mubr.f32.gmra.mrb[0].mxu0 %v655
      %v740 = vpop.f32.mrb[0].mxu0
      %v741 = vadd.f32 0.0, %v740
      %v742 = vpop.f32.mrb[0].mxu0
      %743 = vdwg.mxu0
      %v744 = vadd.f32 %v630, %v726
      %v745 = vadd.f32 %v631, %v731
      %v746 = vadd.f32 %v632, %v736
      %v747 = vadd.f32 %v633, %v741
      %s748 = scalar_lea.vmem %s3, 96
      %v749 = vld [vmem:[%s748] sm:$0xff]
      %v750 = vld [vmem:[%s748 + $0x8] sm:$0xff]
      %v751 = vld [vmem:[%s748 + $0x10] sm:$0xff]
      %v752 = vld [vmem:[%s748 + $0x18] sm:$0xff]
      %v754 = vsel %vm415, %v749, 0
      %v757 = vsel %vm415, %v750, 0
      %v760 = vsel %vm415, %v751, 0
      %v763 = vsel %vm415, %v752, 0
      %v765 = vsel %vm428, %v373, 0
      %767 = vmatprep.subr.mxu0 0.0
      %768 = vmatpush1.msra.mxu0 %v765
      %769 = vmatprep.subr.mxu0 0.0
      %770 = vmatpush1.msra.mxu0 0.0
      %771 = vmatprep.subr.mxu0 0.0
      %772 = vmatpush1.msra.mxu0 0.0
      %773 = vmatprep.subr.mxu0 0.0
      %774 = vmatpush1.msra.mxu0 0.0
      %775 = vmatprep.subr.mxu0 0.0
      %776 = vmatpush1.msra.mxu0 0.0
      %777 = vmatprep.subr.mxu0 0.0
      %778 = vmatpush1.msra.mxu0 0.0
      %779 = vmatprep.subr.mxu0 0.0
      %780 = vmatpush1.msra.mxu0 0.0
      %781 = vmatprep.subr.mxu0 0.0
      %782 = vmatpush1.msra.mxu0 0.0
      %783 = vmatprep.subr.mxu0 0.0
      %784 = vmatpush1.msra.mxu0 0.0
      %785 = vmatprep.subr.mxu0 0.0
      %786 = vmatpush1.msra.mxu0 0.0
      %787 = vmatprep.subr.mxu0 0.0
      %788 = vmatpush1.msra.mxu0 0.0
      %789 = vmatprep.subr.mxu0 0.0
      %790 = vmatpush1.msra.mxu0 0.0
      %791 = vmatprep.subr.mxu0 0.0
      %792 = vmatpush1.msra.mxu0 0.0
      %793 = vmatprep.subr.mxu0 0.0
      %794 = vmatpush1.msra.mxu0 0.0
      %795 = vmatprep.subr.mxu0 0.0
      %796 = vmatpush1.msra.mxu0 0.0
      %797 = vmatprep.subr.mxu0 0.0
      %798 = vmatpush1.msra.mxu0 0.0
      %799 = vmatprep.subr.mxu0 0.0
      %800 = vmatpush1.msra.mxu0 0.0
      %801 = vmatprep.subr.mxu0 0.0
      %802 = vmatpush1.msra.mxu0 0.0
      %803 = vmatprep.subr.mxu0 0.0
      %804 = vmatpush1.msra.mxu0 0.0
      %805 = vmatprep.subr.mxu0 0.0
      %806 = vmatpush1.msra.mxu0 0.0
      %807 = vmatprep.subr.mxu0 0.0
      %808 = vmatpush1.msra.mxu0 0.0
      %809 = vmatprep.subr.mxu0 0.0
      %810 = vmatpush1.msra.mxu0 0.0
      %811 = vmatprep.subr.mxu0 0.0
      %812 = vmatpush1.msra.mxu0 0.0
      %813 = vmatprep.subr.mxu0 0.0
      %814 = vmatpush1.msra.mxu0 0.0
      %815 = vmatprep.subr.mxu0 0.0
      %816 = vmatpush1.msra.mxu0 0.0
      %817 = vmatprep.subr.mxu0 0.0
      %818 = vmatpush1.msra.mxu0 0.0
      %819 = vmatprep.subr.mxu0 0.0
      %820 = vmatpush1.msra.mxu0 0.0
      %821 = vmatprep.subr.mxu0 0.0
      %822 = vmatpush1.msra.mxu0 0.0
      %823 = vmatprep.subr.mxu0 0.0
      %824 = vmatpush1.msra.mxu0 0.0
      %825 = vmatprep.subr.mxu0 0.0
      %826 = vmatpush1.msra.mxu0 0.0
      %827 = vmatprep.subr.mxu0 0.0
      %828 = vmatpush1.msra.mxu0 0.0
      %829 = vmatprep.subr.mxu0 0.0
      %830 = vmatpush1.msra.mxu0 0.0
      %831 = vmatprep.mubr.f32.mxu0 0.0
      %832 = vmatmul.mubr.f32.gmra.mrb[0].mxu0 %v754
      %v833 = vpop.f32.mrb[0].mxu0
      %v834 = vadd.f32 0.0, %v833
      %v835 = vpop.f32.mrb[0].mxu0
      %836 = vmatprep.mubr.f32.mxu0 0.0
      %837 = vmatmul.mubr.f32.gmra.mrb[0].mxu0 %v757
      %v838 = vpop.f32.mrb[0].mxu0
      %v839 = vadd.f32 0.0, %v838
      %v840 = vpop.f32.mrb[0].mxu0
      %841 = vmatprep.mubr.f32.mxu0 0.0
      %842 = vmatmul.mubr.f32.gmra.mrb[0].mxu0 %v760
      %v843 = vpop.f32.mrb[0].mxu0
      %v844 = vadd.f32 0.0, %v843
      %v845 = vpop.f32.mrb[0].mxu0
      %846 = vmatprep.mubr.f32.mxu0 0.0
      %847 = vmatmul.mubr.f32.gmra.mrb[0].mxu0 %v763
      %v848 = vpop.f32.mrb[0].mxu0
      %v849 = vadd.f32 0.0, %v848
      %v850 = vpop.f32.mrb[0].mxu0
      %851 = vdwg.mxu0
      %v852 = vadd.f32 %v744, %v834
      %v853 = vadd.f32 %v745, %v839
      %v854 = vadd.f32 %v746, %v844
      %v855 = vadd.f32 %v747, %v849
      %s856 = scalar_lea.vmem %s3, 128
      %v857 = vld [vmem:[%s856] sm:$0xff]
      %v858 = vld [vmem:[%s856 + $0x8] sm:$0xff]
      %v859 = vld [vmem:[%s856 + $0x10] sm:$0xff]
      %v860 = vld [vmem:[%s856 + $0x18] sm:$0xff]
      %862 = vrot.lane.b32.xlu0 %v373, 127
      %v863 = vpop.permute.xlu0 %862
      %864 = vrot.lane.b32.xlu0 %v378, 127
      %v865 = vpop.permute.xlu0 %864
      %vm866 = vcmask 1039360
      %v867 = vsel %vm866, %v863, %v865
      %v869 = vsel %vm415, %v857, 0
      %v872 = vsel %vm415, %v858, 0
      %v875 = vsel %vm415, %v859, 0
      %v878 = vsel %vm415, %v860, 0
      %v880 = vsel %vm428, %v867, 0
      %882 = vmatprep.subr.mxu0 0.0
      %883 = vmatpush1.msra.mxu0 %v880
      %884 = vmatprep.subr.mxu0 0.0
      %885 = vmatpush1.msra.mxu0 0.0
      %886 = vmatprep.subr.mxu0 0.0
      %887 = vmatpush1.msra.mxu0 0.0
      %888 = vmatprep.subr.mxu0 0.0
      %889 = vmatpush1.msra.mxu0 0.0
      %890 = vmatprep.subr.mxu0 0.0
      %891 = vmatpush1.msra.mxu0 0.0
      %892 = vmatprep.subr.mxu0 0.0
      %893 = vmatpush1.msra.mxu0 0.0
      %894 = vmatprep.subr.mxu0 0.0
      %895 = vmatpush1.msra.mxu0 0.0
      %896 = vmatprep.subr.mxu0 0.0
      %897 = vmatpush1.msra.mxu0 0.0
      %898 = vmatprep.subr.mxu0 0.0
      %899 = vmatpush1.msra.mxu0 0.0
      %900 = vmatprep.subr.mxu0 0.0
      %901 = vmatpush1.msra.mxu0 0.0
      %902 = vmatprep.subr.mxu0 0.0
      %903 = vmatpush1.msra.mxu0 0.0
      %904 = vmatprep.subr.mxu0 0.0
      %905 = vmatpush1.msra.mxu0 0.0
      %906 = vmatprep.subr.mxu0 0.0
      %907 = vmatpush1.msra.mxu0 0.0
      %908 = vmatprep.subr.mxu0 0.0
      %909 = vmatpush1.msra.mxu0 0.0
      %910 = vmatprep.subr.mxu0 0.0
      %911 = vmatpush1.msra.mxu0 0.0
      %912 = vmatprep.subr.mxu0 0.0
      %913 = vmatpush1.msra.mxu0 0.0
      %914 = vmatprep.subr.mxu0 0.0
      %915 = vmatpush1.msra.mxu0 0.0
      %916 = vmatprep.subr.mxu0 0.0
      %917 = vmatpush1.msra.mxu0 0.0
      %918 = vmatprep.subr.mxu0 0.0
      %919 = vmatpush1.msra.mxu0 0.0
      %920 = vmatprep.subr.mxu0 0.0
      %921 = vmatpush1.msra.mxu0 0.0
      %922 = vmatprep.subr.mxu0 0.0
      %923 = vmatpush1.msra.mxu0 0.0
      %924 = vmatprep.subr.mxu0 0.0
      %925 = vmatpush1.msra.mxu0 0.0
      %926 = vmatprep.subr.mxu0 0.0
      %927 = vmatpush1.msra.mxu0 0.0
      %928 = vmatprep.subr.mxu0 0.0
      %929 = vmatpush1.msra.mxu0 0.0
      %930 = vmatprep.subr.mxu0 0.0
      %931 = vmatpush1.msra.mxu0 0.0
      %932 = vmatprep.subr.mxu0 0.0
      %933 = vmatpush1.msra.mxu0 0.0
      %934 = vmatprep.subr.mxu0 0.0
      %935 = vmatpush1.msra.mxu0 0.0
      %936 = vmatprep.subr.mxu0 0.0
      %937 = vmatpush1.msra.mxu0 0.0
      %938 = vmatprep.subr.mxu0 0.0
      %939 = vmatpush1.msra.mxu0 0.0
      %940 = vmatprep.subr.mxu0 0.0
      %941 = vmatpush1.msra.mxu0 0.0
      %942 = vmatprep.subr.mxu0 0.0
      %943 = vmatpush1.msra.mxu0 0.0
      %944 = vmatprep.subr.mxu0 0.0
      %945 = vmatpush1.msra.mxu0 0.0
      %946 = vmatprep.mubr.f32.mxu0 0.0
      %947 = vmatmul.mubr.f32.gmra.mrb[0].mxu0 %v869
      %v948 = vpop.f32.mrb[0].mxu0
      %v949 = vadd.f32 0.0, %v948
      %v950 = vpop.f32.mrb[0].mxu0
      %951 = vmatprep.mubr.f32.mxu0 0.0
      %952 = vmatmul.mubr.f32.gmra.mrb[0].mxu0 %v872
      %v953 = vpop.f32.mrb[0].mxu0
      %v954 = vadd.f32 0.0, %v953
      %v955 = vpop.f32.mrb[0].mxu0
      %956 = vmatprep.mubr.f32.mxu0 0.0
      %957 = vmatmul.mubr.f32.gmra.mrb[0].mxu0 %v875
      %v958 = vpop.f32.mrb[0].mxu0
      %v959 = vadd.f32 0.0, %v958
      %v960 = vpop.f32.mrb[0].mxu0
      %961 = vmatprep.mubr.f32.mxu0 0.0
      %962 = vmatmul.mubr.f32.gmra.mrb[0].mxu0 %v878
      %v963 = vpop.f32.mrb[0].mxu0
      %v964 = vadd.f32 0.0, %v963
      %v965 = vpop.f32.mrb[0].mxu0
      %966 = vdwg.mxu0
      %v967 = vadd.f32 %v852, %v949
      %v968 = vadd.f32 %v853, %v954
      %v969 = vadd.f32 %v854, %v959
      %v970 = vadd.f32 %v855, %v964
      %s971 = scalar_lea.vmem %s3, 160
      %v972 = vld [vmem:[%s971] sm:$0xff]
      %v973 = vld [vmem:[%s971 + $0x8] sm:$0xff]
      %v974 = vld [vmem:[%s971 + $0x10] sm:$0xff]
      %v975 = vld [vmem:[%s971 + $0x18] sm:$0xff]
      %976 = vrot.lane.b32.xlu0 %v373, 126
      %v977 = vpop.permute.xlu0 %976
      %978 = vrot.lane.b32.xlu0 %v378, 126
      %v979 = vpop.permute.xlu0 %978
      %vm980 = vcmask 1031168
      %v981 = vsel %vm980, %v977, %v979
      %v983 = vsel %vm415, %v972, 0
      %v986 = vsel %vm415, %v973, 0
      %v989 = vsel %vm415, %v974, 0
      %v992 = vsel %vm415, %v975, 0
      %v994 = vsel %vm428, %v981, 0
      %996 = vmatprep.subr.mxu0 0.0
      %997 = vmatpush1.msra.mxu0 %v994
      %998 = vmatprep.subr.mxu0 0.0
      %999 = vmatpush1.msra.mxu0 0.0
      %1000 = vmatprep.subr.mxu0 0.0
      %1001 = vmatpush1.msra.mxu0 0.0
      %1002 = vmatprep.subr.mxu0 0.0
      %1003 = vmatpush1.msra.mxu0 0.0
      %1004 = vmatprep.subr.mxu0 0.0
      %1005 = vmatpush1.msra.mxu0 0.0
      %1006 = vmatprep.subr.mxu0 0.0
      %1007 = vmatpush1.msra.mxu0 0.0
      %1008 = vmatprep.subr.mxu0 0.0
      %1009 = vmatpush1.msra.mxu0 0.0
      %1010 = vmatprep.subr.mxu0 0.0
      %1011 = vmatpush1.msra.mxu0 0.0
      %1012 = vmatprep.subr.mxu0 0.0
      %1013 = vmatpush1.msra.mxu0 0.0
      %1014 = vmatprep.subr.mxu0 0.0
      %1015 = vmatpush1.msra.mxu0 0.0
      %1016 = vmatprep.subr.mxu0 0.0
      %1017 = vmatpush1.msra.mxu0 0.0
      %1018 = vmatprep.subr.mxu0 0.0
      %1019 = vmatpush1.msra.mxu0 0.0
      %1020 = vmatprep.subr.mxu0 0.0
      %1021 = vmatpush1.msra.mxu0 0.0
      %1022 = vmatprep.subr.mxu0 0.0
      %1023 = vmatpush1.msra.mxu0 0.0
      %1024 = vmatprep.subr.mxu0 0.0
      %1025 = vmatpush1.msra.mxu0 0.0
      %1026 = vmatprep.subr.mxu0 0.0
      %1027 = vmatpush1.msra.mxu0 0.0
      %1028 = vmatprep.subr.mxu0 0.0
      %1029 = vmatpush1.msra.mxu0 0.0
      %1030 = vmatprep.subr.mxu0 0.0
      %1031 = vmatpush1.msra.mxu0 0.0
      %1032 = vmatprep.subr.mxu0 0.0
      %1033 = vmatpush1.msra.mxu0 0.0
      %1034 = vmatprep.subr.mxu0 0.0
      %1035 = vmatpush1.msra.mxu0 0.0
      %1036 = vmatprep.subr.mxu0 0.0
      %1037 = vmatpush1.msra.mxu0 0.0
      %1038 = vmatprep.subr.mxu0 0.0
      %1039 = vmatpush1.msra.mxu0 0.0
      %1040 = vmatprep.subr.mxu0 0.0
      %1041 = vmatpush1.msra.mxu0 0.0
      %1042 = vmatprep.subr.mxu0 0.0
      %1043 = vmatpush1.msra.mxu0 0.0
      %1044 = vmatprep.subr.mxu0 0.0
      %1045 = vmatpush1.msra.mxu0 0.0
      %1046 = vmatprep.subr.mxu0 0.0
      %1047 = vmatpush1.msra.mxu0 0.0
      %1048 = vmatprep.subr.mxu0 0.0
      %1049 = vmatpush1.msra.mxu0 0.0
      %1050 = vmatprep.subr.mxu0 0.0
      %1051 = vmatpush1.msra.mxu0 0.0
      %1052 = vmatprep.subr.mxu0 0.0
      %1053 = vmatpush1.msra.mxu0 0.0
      %1054 = vmatprep.subr.mxu0 0.0
      %1055 = vmatpush1.msra.mxu0 0.0
      %1056 = vmatprep.subr.mxu0 0.0
      %1057 = vmatpush1.msra.mxu0 0.0
      %1058 = vmatprep.subr.mxu0 0.0
      %1059 = vmatpush1.msra.mxu0 0.0
      %1060 = vmatprep.mubr.f32.mxu0 0.0
      %1061 = vmatmul.mubr.f32.gmra.mrb[0].mxu0 %v983
      %v1062 = vpop.f32.mrb[0].mxu0
      %v1063 = vadd.f32 0.0, %v1062
      %v1064 = vpop.f32.mrb[0].mxu0
      %1065 = vmatprep.mubr.f32.mxu0 0.0
      %1066 = vmatmul.mubr.f32.gmra.mrb[0].mxu0 %v986
      %v1067 = vpop.f32.mrb[0].mxu0
      %v1068 = vadd.f32 0.0, %v1067
      %v1069 = vpop.f32.mrb[0].mxu0
      %1070 = vmatprep.mubr.f32.mxu0 0.0
      %1071 = vmatmul.mubr.f32.gmra.mrb[0].mxu0 %v989
      %v1072 = vpop.f32.mrb[0].mxu0
      %v1073 = vadd.f32 0.0, %v1072
      %v1074 = vpop.f32.mrb[0].mxu0
      %1075 = vmatprep.mubr.f32.mxu0 0.0
      %1076 = vmatmul.mubr.f32.gmra.mrb[0].mxu0 %v992
      %v1077 = vpop.f32.mrb[0].mxu0
      %v1078 = vadd.f32 0.0, %v1077
      %v1079 = vpop.f32.mrb[0].mxu0
      %1080 = vdwg.mxu0
      %v1081 = vadd.f32 %v967, %v1063
      %v1082 = vadd.f32 %v968, %v1068
      %v1083 = vadd.f32 %v969, %v1073
      %v1084 = vadd.f32 %v970, %v1078
      %s1085 = scalar_lea.vmem %s3, 192
      %v1086 = vld [vmem:[%s1085] sm:$0xff]
      %v1087 = vld [vmem:[%s1085 + $0x8] sm:$0xff]
      %v1088 = vld [vmem:[%s1085 + $0x10] sm:$0xff]
      %v1089 = vld [vmem:[%s1085 + $0x18] sm:$0xff]
      %1090 = vrot.lane.b32.xlu0 %v373, 125
      %v1091 = vpop.permute.xlu0 %1090
      %1092 = vrot.lane.b32.xlu0 %v378, 125
      %v1093 = vpop.permute.xlu0 %1092
      %vm1094 = vcmask 1022976
      %v1095 = vsel %vm1094, %v1091, %v1093
      %v1097 = vsel %vm415, %v1086, 0
      %v1100 = vsel %vm415, %v1087, 0
      %v1103 = vsel %vm415, %v1088, 0
      %v1106 = vsel %vm415, %v1089, 0
      %v1108 = vsel %vm428, %v1095, 0
      %1110 = vmatprep.subr.mxu0 0.0
      %1111 = vmatpush1.msra.mxu0 %v1108
      %1112 = vmatprep.subr.mxu0 0.0
      %1113 = vmatpush1.msra.mxu0 0.0
      %1114 = vmatprep.subr.mxu0 0.0
      %1115 = vmatpush1.msra.mxu0 0.0
      %1116 = vmatprep.subr.mxu0 0.0
      %1117 = vmatpush1.msra.mxu0 0.0
      %1118 = vmatprep.subr.mxu0 0.0
      %1119 = vmatpush1.msra.mxu0 0.0
      %1120 = vmatprep.subr.mxu0 0.0
      %1121 = vmatpush1.msra.mxu0 0.0
      %1122 = vmatprep.subr.mxu0 0.0
      %1123 = vmatpush1.msra.mxu0 0.0
      %1124 = vmatprep.subr.mxu0 0.0
      %1125 = vmatpush1.msra.mxu0 0.0
      %1126 = vmatprep.subr.mxu0 0.0
      %1127 = vmatpush1.msra.mxu0 0.0
      %1128 = vmatprep.subr.mxu0 0.0
      %1129 = vmatpush1.msra.mxu0 0.0
      %1130 = vmatprep.subr.mxu0 0.0
      %1131 = vmatpush1.msra.mxu0 0.0
      %1132 = vmatprep.subr.mxu0 0.0
      %1133 = vmatpush1.msra.mxu0 0.0
      %1134 = vmatprep.subr.mxu0 0.0
      %1135 = vmatpush1.msra.mxu0 0.0
      %1136 = vmatprep.subr.mxu0 0.0
      %1137 = vmatpush1.msra.mxu0 0.0
      %1138 = vmatprep.subr.mxu0 0.0
      %1139 = vmatpush1.msra.mxu0 0.0
      %1140 = vmatprep.subr.mxu0 0.0
      %1141 = vmatpush1.msra.mxu0 0.0
      %1142 = vmatprep.subr.mxu0 0.0
      %1143 = vmatpush1.msra.mxu0 0.0
      %1144 = vmatprep.subr.mxu0 0.0
      %1145 = vmatpush1.msra.mxu0 0.0
      %1146 = vmatprep.subr.mxu0 0.0
      %1147 = vmatpush1.msra.mxu0 0.0
      %1148 = vmatprep.subr.mxu0 0.0
      %1149 = vmatpush1.msra.mxu0 0.0
      %1150 = vmatprep.subr.mxu0 0.0
      %1151 = vmatpush1.msra.mxu0 0.0
      %1152 = vmatprep.subr.mxu0 0.0
      %1153 = vmatpush1.msra.mxu0 0.0
      %1154 = vmatprep.subr.mxu0 0.0
      %1155 = vmatpush1.msra.mxu0 0.0
      %1156 = vmatprep.subr.mxu0 0.0
      %1157 = vmatpush1.msra.mxu0 0.0
      %1158 = vmatprep.subr.mxu0 0.0
      %1159 = vmatpush1.msra.mxu0 0.0
      %1160 = vmatprep.subr.mxu0 0.0
      %1161 = vmatpush1.msra.mxu0 0.0
      %1162 = vmatprep.subr.mxu0 0.0
      %1163 = vmatpush1.msra.mxu0 0.0
      %1164 = vmatprep.subr.mxu0 0.0
      %1165 = vmatpush1.msra.mxu0 0.0
      %1166 = vmatprep.subr.mxu0 0.0
      %1167 = vmatpush1.msra.mxu0 0.0
      %1168 = vmatprep.subr.mxu0 0.0
      %1169 = vmatpush1.msra.mxu0 0.0
      %1170 = vmatprep.subr.mxu0 0.0
      %1171 = vmatpush1.msra.mxu0 0.0
      %1172 = vmatprep.subr.mxu0 0.0
      %1173 = vmatpush1.msra.mxu0 0.0
      %1174 = vmatprep.mubr.f32.mxu0 0.0
      %1175 = vmatmul.mubr.f32.gmra.mrb[0].mxu0 %v1097
      %v1176 = vpop.f32.mrb[0].mxu0
      %v1177 = vadd.f32 0.0, %v1176
      %v1178 = vpop.f32.mrb[0].mxu0
      %1179 = vmatprep.mubr.f32.mxu0 0.0
      %1180 = vmatmul.mubr.f32.gmra.mrb[0].mxu0 %v1100
      %v1181 = vpop.f32.mrb[0].mxu0
      %v1182 = vadd.f32 0.0, %v1181
      %v1183 = vpop.f32.mrb[0].mxu0
      %1184 = vmatprep.mubr.f32.mxu0 0.0
      %1185 = vmatmul.mubr.f32.gmra.mrb[0].mxu0 %v1103
      %v1186 = vpop.f32.mrb[0].mxu0
      %v1187 = vadd.f32 0.0, %v1186
      %v1188 = vpop.f32.mrb[0].mxu0
      %1189 = vmatprep.mubr.f32.mxu0 0.0
      %1190 = vmatmul.mubr.f32.gmra.mrb[0].mxu0 %v1106
      %v1191 = vpop.f32.mrb[0].mxu0
      %v1192 = vadd.f32 0.0, %v1191
      %v1193 = vpop.f32.mrb[0].mxu0
      %1194 = vdwg.mxu0
      %v1195 = vadd.f32 %v1081, %v1177
      %v1196 = vadd.f32 %v1082, %v1182
      %v1197 = vadd.f32 %v1083, %v1187
      %v1198 = vadd.f32 %v1084, %v1192
      %1199 = vst [vmem:[%s350] sm:$0xff] %v1195
      %1200 = vst [vmem:[%s350 + $0x8] sm:$0xff] %v1196
      %1201 = vst [vmem:[%s350 + $0x10] sm:$0xff] %v1197
      %1202 = vst [vmem:[%s350 + $0x18] sm:$0xff] %v1198
      %p1203 = scmp.lt.s32.totalorder %s20, 1
      %s1204 = scalar_select %p1203, %s20, 1
      %p1205 = scmp.lt.s32.totalorder %s21, 0
      %s1206 = scalar_select %p1205, %s21, 0
      %s1207 = smul.addr %s1204, 4
      %s1208 = sadd.s32 %s1206, %s1207
      %s1209 = smul.addr %s1208, 8
      %s1210 = scalar_lea.vmem %s5, %s1209
      // Predicated region
      $region41: #{tpu_custom_call.1} parent=39 // pred_check
        %p1211 = pneg %p186
      $region42: #{tpu_custom_call.1} parent=39 // pred_check_branch
        %1213 = sbr.rel (%p1211) target = $region44
      $region43: #{tpu_custom_call.1} parent=39 // pred_region
        _
      $region44: #{tpu_custom_call.1} parent=39 // pred_fallthru
        _
    $region40: #{tpu_custom_call.1} parent=5 // pred_fallthru
      _
    %p1214 = scmp.le.s32.totalorder 2, %s11
    // Predicated region
    $region45: #{tpu_custom_call.1} parent=5 // pred_check
      %p1215 = pneg %p1214
    $region46: #{tpu_custom_call.1} parent=5 // pred_check_branch
      %1217 = sbr.rel (%p1215) target = $region48
    $region47: #{tpu_custom_call.1} parent=5 // pred_region
      %s1218 = ssub.s32 %s11, 2
      // Predicated region
      $region49: #{tpu_custom_call.1} parent=47 // pred_check
        %p1219 = pneg %p192
      $region50: #{tpu_custom_call.1} parent=47 // pred_check_branch
        %1221 = sbr.rel (%p1219) target = $region52
      $region51: #{tpu_custom_call.1} parent=47 // pred_region
        %p1222 = scmp.lt.s32.totalorder %s22, 1
        %s1223 = scalar_select %p1222, %s22, 1
        %p1224 = scmp.lt.s32.totalorder %s23, 0
        %s1225 = scalar_select %p1224, %s23, 0
        %s1226 = smul.addr %s1223, 4
        %s1227 = sadd.s32 %s1225, %s1226
        %s1228 = smul.addr %s1227, 8
        %s1229 = scalar_lea.vmem %s5, %s1228
      $region52: #{tpu_custom_call.1} parent=47 // pred_fallthru
        _
    $region48: #{tpu_custom_call.1} parent=5 // pred_fallthru
      _
  $region6: #{tpu_custom_call.1} parent=0 // loop_footer
    %s15 = sadd.s32 1, %s11
  $region7: #{tpu_custom_call.1} parent=0 // loop_footer_branch
    %10 = sbr.rel target = $region3
  $region8: #{tpu_custom_call.1} parent=0 // loop_exit
    _

</llo_original>
